<compile_context>
chip_gen: v7x
topology: tpu7x:2x2x1
jax: 0.10.0
libtpu: 0.0.40
codegen_flags: <defaults>
</compile_context>

<pallas_src>
import functools
import math

import jax
import jax.numpy as jnp
from jax import lax
from jax.experimental import pallas as pl
from jax.experimental.pallas import tpu as pltpu


class LLaMAConfig:
    def __init__(self, vocab_size=64, hidden_size=32, num_attention_heads=4,
                 intermediate_size=64, rms_norm_eps=1e-6, rope_theta=10000.0,
                 num_hidden_layers=0):
        self.vocab_size = vocab_size
        self.hidden_size = hidden_size
        self.num_attention_heads = num_attention_heads
        self.intermediate_size = intermediate_size
        self.rms_norm_eps = rms_norm_eps
        self.rope_theta = rope_theta
        self.num_hidden_layers = num_hidden_layers


def _round_up(x, m):
    return ((x + m - 1) // m) * m


def _rope_tables_packed(B, S, Np, H, hd, P, theta):
    """cos / sign-folded-sin, one row per flattened token, head-packed lanes.

    Head h, dim d (< hd) lives at lane  h*half + d           (d <  half)
                                   or   P//2 + h*half + d-half (d >= half),
    so rotate_half == pltpu.roll(x, P//2) with the sign folded into sin."""
    half = hd // 2
    inv = 1.0 / (theta ** (jnp.arange(0, hd, 2, dtype=jnp.float32) / hd))
    freqs = jnp.outer(jnp.arange(S, dtype=jnp.float32), inv)          # (S, half)
    cos_h, sin_h = jnp.cos(freqs), jnp.sin(freqs)
    cos = jnp.ones((S, P), jnp.float32)
    sin = jnp.zeros((S, P), jnp.float32)
    for h in range(H):
        lo1, lo2 = h * half, P // 2 + h * half
        cos = cos.at[:, lo1:lo1 + half].set(cos_h)
        cos = cos.at[:, lo2:lo2 + half].set(cos_h)
        sin = sin.at[:, lo1:lo1 + half].set(-sin_h)   # sign-folded rotate_half
        sin = sin.at[:, lo2:lo2 + half].set(sin_h)
    cos = jnp.tile(cos, (B, 1))
    sin = jnp.tile(sin, (B, 1))
    pad = Np - B * S
    if pad:
        cos = jnp.concatenate([cos, jnp.ones((pad, P), jnp.float32)], axis=0)
        sin = jnp.concatenate([sin, jnp.zeros((pad, P), jnp.float32)], axis=0)
    return cos, sin


def _llama_forward_kernel(tok_ref, emb_ref, wqkv_ref, wo_ref, wgu_ref, wd_ref,
                          ln1_ref, ln2_ref, fnorm_ref, cos_ref, sin_ref,
                          out_ref, *, B, S, D, H, hd, eps):
    f32, bf16 = jnp.float32, jnp.bfloat16
    NEG = jnp.float32(-1e30)
    Np, P = cos_ref.shape
    V = emb_ref.shape[0]
    Ip = wd_ref.shape[1]
    L = wqkv_ref.shape[0]
    Ntok = B * S
    half = hd // 2
    inv_d = 1.0 / D
    scale = 1.0 / math.sqrt(hd)

    def rmsnorm(x, gain):                                   # gain: (1, Dp)
        var = jnp.sum(x * x, axis=-1, keepdims=True) * inv_d
        return x * lax.rsqrt(var + eps) * gain

    # ----------------- loop-invariant prep (computed once) -----------------
    # Embedding gather as a one-hot iota-compare matmul (out-of-range pad ids
    # yield all-zero rows, so padded token rows start at zero).
    tok = tok_ref[...]                                               # (Np,1) i32
    onehot = (lax.broadcasted_iota(jnp.int32, (Np, V), 1) == tok).astype(bf16)
    h0 = jnp.dot(onehot, emb_ref[...], preferred_element_type=f32)   # (Np, Dp)

    cos = cos_ref[...]                                               # (Np, P)
    sinr = sin_ref[...]

    # Per-head lane mask for the packed head layout (iota compares, no div).
    lane = lax.broadcasted_iota(jnp.int32, (H, P), 1)
    hh = lax.broadcasted_iota(jnp.int32, (H, P), 0)
    base = hh * half
    in1 = (lane >= base) & (lane < base + half)
    base2 = base + P // 2
    in2 = (lane >= base2) & (lane < base2 + half)
    head_mask = jnp.where(in1 | in2, 1.0, 0.0)[:, None, :]           # (H,1,P) f32

    # Batch-block-diagonal causal additive mask, generated in-kernel.
    r = lax.broadcasted_iota(jnp.int32, (Np, Np), 0)
    c = lax.broadcasted_iota(jnp.int32, (Np, Np), 1)
    allowed = (c <= r) & (r < Ntok)
    same_b = None
    for b in range(B):            # static B iterations of VPU compares
        lo = b * S
        term = (r >= lo) & (r < lo + S) & (c >= lo)
        same_b = term if same_b is None else (same_b | term)
    attn_bias = jnp.where(allowed & same_b, 0.0, NEG)[None]          # (1,Np,Np)
    # Note: rows beyond Ntok are fully masked -> their softmax is uniform over
    # garbage; those residual rows are never read by the tail (benign).

    # --------------------------- decoder layers ---------------------------
    def layer(l, h):
        # --- attention block (fused QKV, head-packed lanes) ---
        xn = rmsnorm(h, ln1_ref[l]).astype(bf16)                     # (Np, Dp)
        qkv = jnp.dot(xn, wqkv_ref[l], preferred_element_type=f32)   # (Np, 3P)
        q, k, v = qkv[:, :P], qkv[:, P:2 * P], qkv[:, 2 * P:]

        # RoPE: rotate_half == lane roll by P//2 (sign folded into sin table).
        q = q * cos + pltpu.roll(q, shift=P // 2, axis=1) * sinr
        k = k * cos + pltpu.roll(k, shift=P // 2, axis=1) * sinr

        # Per-head scores via head-lane-masked batched matmul.
        qm = (q[None] * head_mask).astype(bf16)                      # (H,Np,P)
        kb = jnp.broadcast_to(k.astype(bf16)[None], (H, Np, P))
        s = jnp.einsum('hnd,hmd->hnm', qm, kb,
                       preferred_element_type=f32) * scale           # (H,Np,Np)
        s = s + attn_bias
        m = jnp.max(s, axis=-1, keepdims=True)
        e = jnp.exp(s - m)
        p = e / jnp.sum(e, axis=-1, keepdims=True)                   # exact

        vm = (v[None] * head_mask).astype(bf16)                      # (H,Np,P)
        o = jnp.einsum('hnm,hmd->hnd', p.astype(bf16), vm,
                       preferred_element_type=f32)                   # (H,Np,P)
        o_packed = jnp.sum(o, axis=0).astype(bf16)                   # (Np, P)
        h = h + jnp.dot(o_packed, wo_ref[l], preferred_element_type=f32)

        # --- MLP block (fused gate/up) ---
        xn2 = rmsnorm(h, ln2_ref[l]).astype(bf16)
        gu = jnp.dot(xn2, wgu_ref[l], preferred_element_type=f32)    # (Np, 2Ip)
        g, u = gu[:, :Ip], gu[:, Ip:]
        sig = 0.5 * (jnp.tanh(0.5 * g) + 1.0)        # exact sigmoid, 1 EUP op
        act = (g * sig * u).astype(bf16)
        h = h + jnp.dot(act, wd_ref[l], preferred_element_type=f32)
        return h

    h = lax.fori_loop(0, L, layer, h0)

    # ------------------- tail: final RMSNorm + argmax ----------------------
    # Last-token rows picked with a tiny selector matmul (no sublane relayout).
    ri = lax.broadcasted_iota(jnp.int32, (B, Np), 0)
    ci = lax.broadcasted_iota(jnp.int32, (B, Np), 1)
    sel = (ci == ri * S + (S - 1)).astype(f32)
    last = jnp.dot(sel, h, preferred_element_type=f32)               # (B, Dp)
    lastn = rmsnorm(last, fnorm_ref[...])
    laneD = lax.broadcasted_iota(jnp.int32, lastn.shape, 1)
    valid = laneD < D
    vals = jnp.where(valid, lastn, NEG)
    mx = jnp.max(vals, axis=-1, keepdims=True)
    cand = jnp.where((vals >= mx) & valid, laneD, lastn.shape[1])    # first max
    out_ref[...] = jnp.min(cand, axis=-1, keepdims=True).astype(jnp.int32)


class PallasDistributedLLaMa:
    """Pallas equivalent of DistributedLLaMa(config, gpus, gpu_per_node).

    Each RPC stage holds 10 decoder layers (layer_nums = [10]*gpus); numerically
    the forward is just the stacked layers, so all stage weights are stacked on
    a leading layer axis, packed head-dense, and kept resident in VMEM."""

    def __init__(self, config: LLaMAConfig, gpus=2, gpu_per_node=2,
                 key=jax.random.PRNGKey(0)):
        assert gpus % gpu_per_node == 0
        layer_nums = [10] * gpus                 # same sharding as torch module
        L = sum(layer_nums)
        D, V, I = config.hidden_size, config.vocab_size, config.intermediate_size
        H = config.num_attention_heads
        hd = D // H
        assert hd % 2 == 0, "RoPE requires an even head dim"
        half = hd // 2
        Dp, Ip = _round_up(D, 128), _round_up(I, 128)
        P = _round_up(H * hd, 128)               # all heads packed along lanes

        f32, bf = jnp.float32, jnp.bfloat16
        std = 0.02
        ks = jax.random.split(key, 8)
        emb_t = jax.random.normal(ks[0], (V, D), f32) * std
        wq_t = jax.random.normal(ks[1], (L, D, D), f32) * std
        wk_t = jax.random.normal(ks[2], (L, D, D), f32) * std
        wv_t = jax.random.normal(ks[3], (L, D, D), f32) * std
        wo_t = jax.random.normal(ks[4], (L, D, D), f32) * std
        wg_t = jax.random.normal(ks[5], (L, D, I), f32) * std
        wu_t = jax.random.normal(ks[6], (L, D, I), f32) * std
        wd_t = jax.random.normal(ks[7], (L, I, D), f32) * std
        # TODO(synk): real checkpoints use nn.Linear (x @ W.T); loading trained
        # weights needs a transpose + head repack matching q/k/v/o_proj layout.

        def pack_cols(w):   # (L, D, H*hd) -> (L, Dp, P): head-packed columns
            out = jnp.zeros((L, Dp, P), bf)
            for h in range(H):
                lo1, lo2 = h * half, P // 2 + h * half
                blk = w[:, :, h * hd:(h + 1) * hd].astype(bf)
                out = out.at[:, :D, lo1:lo1 + half].set(blk[..., :half])
                out = out.at[:, :D, lo2:lo2 + half].set(blk[..., half:])
            return out

        def pack_rows(w):   # (L, H*hd, D) -> (L, P, Dp): head-packed rows
            out = jnp.zeros((L, P, Dp), bf)
            for h in range(H):
                lo1, lo2 = h * half, P // 2 + h * half
                blk = w[:, h * hd:(h + 1) * hd, :].astype(bf)
                out = out.at[:, lo1:lo1 + half, :D].set(blk[:, :half, :])
                out = out.at[:, lo2:lo2 + half, :D].set(blk[:, half:, :])
            return out

        def pad2(w, r, c, rp, cp):
            return jnp.zeros((L, rp, cp), bf).at[:, :r, :c].set(w.astype(bf))

        wqkv = jnp.concatenate(
            [pack_cols(wq_t), pack_cols(wk_t), pack_cols(wv_t)], axis=2)
        wgu = jnp.concatenate(
            [pad2(wg_t, D, I, Dp, Ip), pad2(wu_t, D, I, Dp, Ip)], axis=2)

        self.config = config
        self.num_layers = L
        self.dims = dict(D=D, V=V, I=I, H=H, hd=hd, Dp=Dp, Ip=Ip, P=P)
        self.params = dict(
            emb=jnp.zeros((V, Dp), bf).at[:, :D].set(emb_t.astype(bf)),
            wqkv=wqkv,                               # (L, Dp, 3P) fused QKV
            wo=pack_rows(wo_t),                      # (L, P, Dp)
            wgu=wgu,                                 # (L, Dp, 2Ip) fused gate/up
            wd=pad2(wd_t, I, D, Ip, Dp),             # (L, Ip, Dp)
            ln1=jnp.ones((L, 1, Dp), f32), ln2=jnp.ones((L, 1, Dp), f32),
            fnorm=jnp.ones((1, Dp), f32),
        )

    def forward(self, ids, session: int = 0):
        # TODO(synk): per-session past-KV caching / reset_past_kv / generate*
        # are stateful serving machinery; this is the empty-cache causal
        # forward (what one DistributedLLaMa.forward computes).
        del session
        B, S = ids.shape
        cfg, d, p = self.config, self.dims, self.params
        D, H, hd = d['D'], d['H'], d['hd']
        P, V = d['P'], d['V']
        Ntok = B * S
        Np = _round_up(Ntok, 8)

        cosn, sinn = _rope_tables_packed(B, S, Np, H, hd, P, cfg.rope_theta)

        tok = ids.reshape(-1).astype(jnp.int32)
        if Np > Ntok:   # pad with out-of-range id -> all-zero one-hot rows
            tok = jnp.concatenate(
                [tok, jnp.full((Np - Ntok,), V, jnp.int32)], axis=0)
        tok = tok.reshape(Np, 1)

        kern = functools.partial(_llama_forward_kernel, B=B, S=S, D=D, H=H,
                                 hd=hd, eps=cfg.rms_norm_eps)

        n_in = 11
        vmem = pltpu.MemorySpace.VMEM
        return pl.pallas_call(
            kern,
            out_shape=jax.ShapeDtypeStruct((B, 1), jnp.int32),
            in_specs=[pl.BlockSpec(memory_space=vmem) for _ in range(n_in)],
            out_specs=pl.BlockSpec(memory_space=vmem),
            compiler_params=pltpu.CompilerParams(
                vmem_limit_bytes=32 * 1024 * 1024,   # ~4.6 MB resident weights
            ),
        )(tok, p['emb'], p['wqkv'], p['wo'], p['wgu'], p['wd'],
          p['ln1'], p['ln2'], p['fnorm'], cosn, sinn)


if __name__ == "__main__":
    cfg = LLaMAConfig(vocab_size=64, hidden_size=32, num_attention_heads=4,
                      intermediate_size=64)
    key = jax.random.PRNGKey(0)
    k_model, k_ids = jax.random.split(key)
    model = PallasDistributedLLaMa(cfg, gpus=2, gpu_per_node=2, key=k_model)

    B, S = 2, 8
    ids = jax.random.randint(k_ids, (B, S), 0, cfg.vocab_size, dtype=jnp.int32)

    out = model.forward(ids, session=0)
    out = jax.block_until_ready(out)
    assert out.shape == (B, 1) and out.dtype == jnp.int32
    print("KERNEL_OK")
</pallas_src>

<mosaic_0001>
module attributes {stable_mosaic.version = 11 : i64} {
  func.func @_llama_forward_kernel(%arg0: memref<16x1xi32, #tpu.memory_space<vmem>>, %arg1: memref<64x128xbf16, #tpu.memory_space<vmem>>, %arg2: memref<20x128x384xbf16, #tpu.memory_space<vmem>>, %arg3: memref<20x128x128xbf16, #tpu.memory_space<vmem>>, %arg4: memref<20x128x256xbf16, #tpu.memory_space<vmem>>, %arg5: memref<20x128x128xbf16, #tpu.memory_space<vmem>>, %arg6: memref<20x1x128xf32, #tpu.memory_space<vmem>>, %arg7: memref<20x1x128xf32, #tpu.memory_space<vmem>>, %arg8: memref<1x128xf32, #tpu.memory_space<vmem>>, %arg9: memref<16x128xf32, #tpu.memory_space<vmem>>, %arg10: memref<16x128xf32, #tpu.memory_space<vmem>>, %arg11: memref<2x1xi32, #tpu.memory_space<vmem>>) attributes {dimension_semantics = [], scalar_prefetch = 0 : i64, scratch_operands = 0 : i64, tpu.core_type = #tpu.core_type<tc>} {
    %c0 = arith.constant 0 : index
    %c0_0 = arith.constant 0 : index
    %0 = vector.load %arg0[%c0, %c0_0] : memref<16x1xi32, #tpu.memory_space<vmem>>, vector<16x1xi32>
    %1 = tpu.iota {dimensions = array<i32: 1>} : vector<16x64xi32>
    %2 = vector.broadcast %0 : vector<16x1xi32> to vector<16x64xi32>
    %3 = arith.cmpi eq, %1, %2 : vector<16x64xi32>
    %4 = arith.extui %3 : vector<16x64xi1> to vector<16x64xi32>
    %5 = arith.sitofp %4 : vector<16x64xi32> to vector<16x64xf32>
    %6 = arith.truncf %5 : vector<16x64xf32> to vector<16x64xbf16>
    %c0_1 = arith.constant 0 : index
    %c0_2 = arith.constant 0 : index
    %7 = vector.load %arg1[%c0_1, %c0_2] : memref<64x128xbf16, #tpu.memory_space<vmem>>, vector<64x128xbf16>
    %cst = arith.constant dense<0.000000e+00> : vector<16x128xf32>
    %8 = tpu.matmul %6, %7, %cst {dimension_numbers = #tpu.dot_dimension_numbers<[1], [0], [0], [1], [0, 0, 1, 1], [], []>} : vector<16x64xbf16>, vector<64x128xbf16>, vector<16x128xf32> -> vector<16x128xf32>
    %c0_3 = arith.constant 0 : index
    %c0_4 = arith.constant 0 : index
    %9 = vector.load %arg9[%c0_3, %c0_4] : memref<16x128xf32, #tpu.memory_space<vmem>>, vector<16x128xf32>
    %c0_5 = arith.constant 0 : index
    %c0_6 = arith.constant 0 : index
    %10 = vector.load %arg10[%c0_5, %c0_6] : memref<16x128xf32, #tpu.memory_space<vmem>>, vector<16x128xf32>
    %11 = tpu.iota {dimensions = array<i32: 1>} : vector<4x128xi32>
    %12 = tpu.iota {dimensions = array<i32: 0>} : vector<4x128xi32>
    %c4_i32 = arith.constant 4 : i32
    %13 = vector.broadcast %c4_i32 : i32 to vector<4x128xi32>
    %14 = arith.muli %12, %13 : vector<4x128xi32>
    %15 = arith.cmpi sge, %11, %14 : vector<4x128xi32>
    %c4_i32_7 = arith.constant 4 : i32
    %16 = vector.broadcast %c4_i32_7 : i32 to vector<4x128xi32>
    %17 = arith.addi %14, %16 : vector<4x128xi32>
    %18 = arith.cmpi slt, %11, %17 : vector<4x128xi32>
    %19 = arith.andi %15, %18 : vector<4x128xi1>
    %c64_i32 = arith.constant 64 : i32
    %20 = vector.broadcast %c64_i32 : i32 to vector<4x128xi32>
    %21 = arith.addi %14, %20 : vector<4x128xi32>
    %22 = arith.cmpi sge, %11, %21 : vector<4x128xi32>
    %c4_i32_8 = arith.constant 4 : i32
    %23 = vector.broadcast %c4_i32_8 : i32 to vector<4x128xi32>
    %24 = arith.addi %21, %23 : vector<4x128xi32>
    %25 = arith.cmpi slt, %11, %24 : vector<4x128xi32>
    %26 = arith.andi %22, %25 : vector<4x128xi1>
    %27 = arith.ori %19, %26 : vector<4x128xi1>
    %cst_9 = arith.constant 1.000000e+00 : f32
    %cst_10 = arith.constant 0.000000e+00 : f32
    %28 = vector.broadcast %cst_9 : f32 to vector<4x128xf32>
    %29 = vector.broadcast %cst_10 : f32 to vector<4x128xf32>
    %30 = arith.select %27, %28, %29 : vector<4x128xi1>, vector<4x128xf32>
    %31 = vector.shape_cast %30 : vector<4x128xf32> to vector<4x1x128xf32>
    %32 = tpu.iota {dimensions = array<i32: 0>} : vector<16x16xi32>
    %33 = tpu.iota {dimensions = array<i32: 1>} : vector<16x16xi32>
    %34 = arith.cmpi sle, %33, %32 : vector<16x16xi32>
    %c16_i32 = arith.constant 16 : i32
    %35 = vector.broadcast %c16_i32 : i32 to vector<16x16xi32>
    %36 = arith.cmpi slt, %32, %35 : vector<16x16xi32>
    %37 = arith.andi %34, %36 : vector<16x16xi1>
    %c0_i32 = arith.constant 0 : i32
    %38 = vector.broadcast %c0_i32 : i32 to vector<16x16xi32>
    %39 = arith.cmpi sge, %32, %38 : vector<16x16xi32>
    %c8_i32 = arith.constant 8 : i32
    %40 = vector.broadcast %c8_i32 : i32 to vector<16x16xi32>
    %41 = arith.cmpi slt, %32, %40 : vector<16x16xi32>
    %42 = arith.andi %39, %41 : vector<16x16xi1>
    %c0_i32_11 = arith.constant 0 : i32
    %43 = vector.broadcast %c0_i32_11 : i32 to vector<16x16xi32>
    %44 = arith.cmpi sge, %33, %43 : vector<16x16xi32>
    %45 = arith.andi %42, %44 : vector<16x16xi1>
    %c8_i32_12 = arith.constant 8 : i32
    %46 = vector.broadcast %c8_i32_12 : i32 to vector<16x16xi32>
    %47 = arith.cmpi sge, %32, %46 : vector<16x16xi32>
    %c16_i32_13 = arith.constant 16 : i32
    %48 = vector.broadcast %c16_i32_13 : i32 to vector<16x16xi32>
    %49 = arith.cmpi slt, %32, %48 : vector<16x16xi32>
    %50 = arith.andi %47, %49 : vector<16x16xi1>
    %c8_i32_14 = arith.constant 8 : i32
    %51 = vector.broadcast %c8_i32_14 : i32 to vector<16x16xi32>
    %52 = arith.cmpi sge, %33, %51 : vector<16x16xi32>
    %53 = arith.andi %50, %52 : vector<16x16xi1>
    %54 = arith.ori %45, %53 : vector<16x16xi1>
    %55 = arith.andi %37, %54 : vector<16x16xi1>
    %cst_15 = arith.constant 0.000000e+00 : f32
    %cst_16 = arith.constant -1.000000e+30 : f32
    %56 = vector.broadcast %cst_15 : f32 to vector<16x16xf32>
    %57 = vector.broadcast %cst_16 : f32 to vector<16x16xf32>
    %58 = arith.select %55, %56, %57 : vector<16x16xi1>, vector<16x16xf32>
    %59 = vector.shape_cast %58 : vector<16x16xf32> to vector<1x16x16xf32>
    %c0_i32_17 = arith.constant 0 : i32
    %c20_i32 = arith.constant 20 : i32
    %60 = arith.addi %c0_i32_17, %c20_i32 : i32
    %c1_i32 = arith.constant 1 : i32
    %61 = scf.for %arg12 = %c0_i32_17 to %60 step %c1_i32 iter_args(%arg13 = %8) -> (vector<16x128xf32>)  : i32 {
      %100 = arith.index_cast %arg12 : i32 to index
      %c0_31 = arith.constant 0 : index
      %c0_32 = arith.constant 0 : index
      %101 = vector.load %arg6[%100, %c0_31, %c0_32] : memref<20x1x128xf32, #tpu.memory_space<vmem>>, vector<1x1x128xf32>
      %102 = vector.shape_cast %101 : vector<1x1x128xf32> to vector<1x128xf32>
      %103 = arith.mulf %arg13, %arg13 : vector<16x128xf32>
      %cst_33 = arith.constant dense<0.000000e+00> : vector<16xf32>
      %104 = vector.multi_reduction <add>, %103, %cst_33 [1] : vector<16x128xf32> to vector<16xf32>
      %105 = vector.shape_cast %104 : vector<16xf32> to vector<16x1xf32>
      %cst_34 = arith.constant 3.125000e-02 : f32
      %106 = vector.broadcast %cst_34 : f32 to vector<16x1xf32>
      %107 = arith.mulf %105, %106 : vector<16x1xf32>
      %cst_35 = arith.constant 9.99999997E-7 : f32
      %108 = vector.broadcast %cst_35 : f32 to vector<16x1xf32>
      %109 = arith.addf %107, %108 : vector<16x1xf32>
      %110 = math.rsqrt %109 : vector<16x1xf32>
      %111 = vector.broadcast %110 : vector<16x1xf32> to vector<16x128xf32>
      %112 = arith.mulf %arg13, %111 : vector<16x128xf32>
      %113 = vector.broadcast %102 : vector<1x128xf32> to vector<16x128xf32>
      %114 = arith.mulf %112, %113 : vector<16x128xf32>
      %115 = arith.truncf %114 : vector<16x128xf32> to vector<16x128xbf16>
      %116 = arith.index_cast %arg12 : i32 to index
      %c0_36 = arith.constant 0 : index
      %c0_37 = arith.constant 0 : index
      %117 = vector.load %arg2[%116, %c0_36, %c0_37] : memref<20x128x384xbf16, #tpu.memory_space<vmem>>, vector<1x128x384xbf16>
      %118 = vector.shape_cast %117 : vector<1x128x384xbf16> to vector<128x384xbf16>
      %cst_38 = arith.constant dense<0.000000e+00> : vector<16x384xf32>
      %119 = tpu.matmul %115, %118, %cst_38 {dimension_numbers = #tpu.dot_dimension_numbers<[1], [0], [0], [1], [0, 0, 1, 1], [], []>} : vector<16x128xbf16>, vector<128x384xbf16>, vector<16x384xf32> -> vector<16x384xf32>
      %120 = vector.extract_strided_slice %119 {offsets = [0, 0], sizes = [16, 128], strides = [1, 1]} : vector<16x384xf32> to vector<16x128xf32>
      %121 = vector.extract_strided_slice %119 {offsets = [0, 128], sizes = [16, 128], strides = [1, 1]} : vector<16x384xf32> to vector<16x128xf32>
      %122 = vector.extract_strided_slice %119 {offsets = [0, 256], sizes = [16, 128], strides = [1, 1]} : vector<16x384xf32> to vector<16x128xf32>
      %123 = arith.mulf %120, %9 : vector<16x128xf32>
      %c64_i32_39 = arith.constant 64 : i32
      %124 = tpu.dynamic_rotate %120 by %c64_i32_39 dim 1 : vector<16x128xf32>, i32 -> vector<16x128xf32>
      %125 = arith.mulf %124, %10 : vector<16x128xf32>
      %126 = arith.addf %123, %125 : vector<16x128xf32>
      %127 = arith.mulf %121, %9 : vector<16x128xf32>
      %c64_i32_40 = arith.constant 64 : i32
      %128 = tpu.dynamic_rotate %121 by %c64_i32_40 dim 1 : vector<16x128xf32>, i32 -> vector<16x128xf32>
      %129 = arith.mulf %128, %10 : vector<16x128xf32>
      %130 = arith.addf %127, %129 : vector<16x128xf32>
      %131 = vector.shape_cast %126 : vector<16x128xf32> to vector<1x16x128xf32>
      %132 = vector.broadcast %131 : vector<1x16x128xf32> to vector<4x16x128xf32>
      %133 = vector.broadcast %31 : vector<4x1x128xf32> to vector<4x16x128xf32>
      %134 = arith.mulf %132, %133 : vector<4x16x128xf32>
      %135 = arith.truncf %134 : vector<4x16x128xf32> to vector<4x16x128xbf16>
      %136 = arith.truncf %130 : vector<16x128xf32> to vector<16x128xbf16>
      %137 = vector.shape_cast %136 : vector<16x128xbf16> to vector<1x16x128xbf16>
      %138 = vector.shape_cast %137 : vector<1x16x128xbf16> to vector<1x16x128xbf16>
      %139 = vector.broadcast %138 : vector<1x16x128xbf16> to vector<4x16x128xbf16>
      "tpu.trace_start"() <{level = 10 : i32, message = "hnd,hmd->hnm"}> : () -> ()
      %cst_41 = arith.constant dense<0.000000e+00> : vector<4x16x16xf32>
      %140 = tpu.matmul %135, %139, %cst_41 {dimension_numbers = #tpu.dot_dimension_numbers<[2], [2], [1], [1], [0, 0, 0, 1, 1, 1], [0], [0]>} : vector<4x16x128xbf16>, vector<4x16x128xbf16>, vector<4x16x16xf32> -> vector<4x16x16xf32>
      "tpu.trace_stop"() : () -> ()
      %cst_42 = arith.constant 0.353553385 : f32
      %141 = vector.broadcast %cst_42 : f32 to vector<4x16x16xf32>
      %142 = arith.mulf %140, %141 : vector<4x16x16xf32>
      %143 = vector.broadcast %59 : vector<1x16x16xf32> to vector<4x16x16xf32>
      %144 = arith.addf %142, %143 : vector<4x16x16xf32>
      %cst_43 = arith.constant dense<0xFF800000> : vector<4x16xf32>
      %145 = vector.multi_reduction <maximumf>, %144, %cst_43 [2] : vector<4x16x16xf32> to vector<4x16xf32>
      %146 = vector.shape_cast %145 : vector<4x16xf32> to vector<4x16x1xf32>
      %147 = vector.broadcast %146 : vector<4x16x1xf32> to vector<4x16x16xf32>
      %148 = arith.subf %144, %147 : vector<4x16x16xf32>
      %149 = math.exp %148 : vector<4x16x16xf32>
      %cst_44 = arith.constant dense<0.000000e+00> : vector<4x16xf32>
      %150 = vector.multi_reduction <add>, %149, %cst_44 [2] : vector<4x16x16xf32> to vector<4x16xf32>
      %151 = vector.shape_cast %150 : vector<4x16xf32> to vector<4x16x1xf32>
      %152 = vector.broadcast %151 : vector<4x16x1xf32> to vector<4x16x16xf32>
      %153 = arith.divf %149, %152 : vector<4x16x16xf32>
      %154 = vector.shape_cast %122 : vector<16x128xf32> to vector<1x16x128xf32>
      %155 = vector.broadcast %154 : vector<1x16x128xf32> to vector<4x16x128xf32>
      %156 = vector.broadcast %31 : vector<4x1x128xf32> to vector<4x16x128xf32>
      %157 = arith.mulf %155, %156 : vector<4x16x128xf32>
      %158 = arith.truncf %157 : vector<4x16x128xf32> to vector<4x16x128xbf16>
      %159 = arith.truncf %153 : vector<4x16x16xf32> to vector<4x16x16xbf16>
      "tpu.trace_start"() <{level = 10 : i32, message = "hnm,hmd->hnd"}> : () -> ()
      %cst_45 = arith.constant dense<0.000000e+00> : vector<4x16x128xf32>
      %160 = tpu.matmul %159, %158, %cst_45 {dimension_numbers = #tpu.dot_dimension_numbers<[2], [1], [1], [2], [0, 0, 0, 1, 1, 2], [0], [0]>} : vector<4x16x16xbf16>, vector<4x16x128xbf16>, vector<4x16x128xf32> -> vector<4x16x128xf32>
      "tpu.trace_stop"() : () -> ()
      %cst_46 = arith.constant dense<0.000000e+00> : vector<16x128xf32>
      %161 = vector.multi_reduction <add>, %160, %cst_46 [0] : vector<4x16x128xf32> to vector<16x128xf32>
      %162 = arith.truncf %161 : vector<16x128xf32> to vector<16x128xbf16>
      %163 = arith.index_cast %arg12 : i32 to index
      %c0_47 = arith.constant 0 : index
      %c0_48 = arith.constant 0 : index
      %164 = vector.load %arg3[%163, %c0_47, %c0_48] : memref<20x128x128xbf16, #tpu.memory_space<vmem>>, vector<1x128x128xbf16>
      %165 = vector.shape_cast %164 : vector<1x128x128xbf16> to vector<128x128xbf16>
      %cst_49 = arith.constant dense<0.000000e+00> : vector<16x128xf32>
      %166 = tpu.matmul %162, %165, %cst_49 {dimension_numbers = #tpu.dot_dimension_numbers<[1], [0], [0], [1], [0, 0, 1, 1], [], []>} : vector<16x128xbf16>, vector<128x128xbf16>, vector<16x128xf32> -> vector<16x128xf32>
      %167 = arith.addf %arg13, %166 : vector<16x128xf32>
      %168 = arith.index_cast %arg12 : i32 to index
      %c0_50 = arith.constant 0 : index
      %c0_51 = arith.constant 0 : index
      %169 = vector.load %arg7[%168, %c0_50, %c0_51] : memref<20x1x128xf32, #tpu.memory_space<vmem>>, vector<1x1x128xf32>
      %170 = vector.shape_cast %169 : vector<1x1x128xf32> to vector<1x128xf32>
      %171 = arith.mulf %167, %167 : vector<16x128xf32>
      %cst_52 = arith.constant dense<0.000000e+00> : vector<16xf32>
      %172 = vector.multi_reduction <add>, %171, %cst_52 [1] : vector<16x128xf32> to vector<16xf32>
      %173 = vector.shape_cast %172 : vector<16xf32> to vector<16x1xf32>
      %cst_53 = arith.constant 3.125000e-02 : f32
      %174 = vector.broadcast %cst_53 : f32 to vector<16x1xf32>
      %175 = arith.mulf %173, %174 : vector<16x1xf32>
      %cst_54 = arith.constant 9.99999997E-7 : f32
      %176 = vector.broadcast %cst_54 : f32 to vector<16x1xf32>
      %177 = arith.addf %175, %176 : vector<16x1xf32>
      %178 = math.rsqrt %177 : vector<16x1xf32>
      %179 = vector.broadcast %178 : vector<16x1xf32> to vector<16x128xf32>
      %180 = arith.mulf %167, %179 : vector<16x128xf32>
      %181 = vector.broadcast %170 : vector<1x128xf32> to vector<16x128xf32>
      %182 = arith.mulf %180, %181 : vector<16x128xf32>
      %183 = arith.truncf %182 : vector<16x128xf32> to vector<16x128xbf16>
      %184 = arith.index_cast %arg12 : i32 to index
      %c0_55 = arith.constant 0 : index
      %c0_56 = arith.constant 0 : index
      %185 = vector.load %arg4[%184, %c0_55, %c0_56] : memref<20x128x256xbf16, #tpu.memory_space<vmem>>, vector<1x128x256xbf16>
      %186 = vector.shape_cast %185 : vector<1x128x256xbf16> to vector<128x256xbf16>
      %cst_57 = arith.constant dense<0.000000e+00> : vector<16x256xf32>
      %187 = tpu.matmul %183, %186, %cst_57 {dimension_numbers = #tpu.dot_dimension_numbers<[1], [0], [0], [1], [0, 0, 1, 1], [], []>} : vector<16x128xbf16>, vector<128x256xbf16>, vector<16x256xf32> -> vector<16x256xf32>
      %188 = vector.extract_strided_slice %187 {offsets = [0, 0], sizes = [16, 128], strides = [1, 1]} : vector<16x256xf32> to vector<16x128xf32>
      %189 = vector.extract_strided_slice %187 {offsets = [0, 128], sizes = [16, 128], strides = [1, 1]} : vector<16x256xf32> to vector<16x128xf32>
      %cst_58 = arith.constant 5.000000e-01 : f32
      %190 = vector.broadcast %cst_58 : f32 to vector<16x128xf32>
      %191 = arith.mulf %190, %188 : vector<16x128xf32>
      %192 = math.tanh %191 : vector<16x128xf32>
      %cst_59 = arith.constant 1.000000e+00 : f32
      %193 = vector.broadcast %cst_59 : f32 to vector<16x128xf32>
      %194 = arith.addf %192, %193 : vector<16x128xf32>
      %cst_60 = arith.constant 5.000000e-01 : f32
      %195 = vector.broadcast %cst_60 : f32 to vector<16x128xf32>
      %196 = arith.mulf %195, %194 : vector<16x128xf32>
      %197 = arith.mulf %188, %196 : vector<16x128xf32>
      %198 = arith.mulf %197, %189 : vector<16x128xf32>
      %199 = arith.truncf %198 : vector<16x128xf32> to vector<16x128xbf16>
      %200 = arith.index_cast %arg12 : i32 to index
      %c0_61 = arith.constant 0 : index
      %c0_62 = arith.constant 0 : index
      %201 = vector.load %arg5[%200, %c0_61, %c0_62] : memref<20x128x128xbf16, #tpu.memory_space<vmem>>, vector<1x128x128xbf16>
      %202 = vector.shape_cast %201 : vector<1x128x128xbf16> to vector<128x128xbf16>
      %cst_63 = arith.constant dense<0.000000e+00> : vector<16x128xf32>
      %203 = tpu.matmul %199, %202, %cst_63 {dimension_numbers = #tpu.dot_dimension_numbers<[1], [0], [0], [1], [0, 0, 1, 1], [], []>} : vector<16x128xbf16>, vector<128x128xbf16>, vector<16x128xf32> -> vector<16x128xf32>
      %204 = arith.addf %167, %203 : vector<16x128xf32>
      scf.yield %204 : vector<16x128xf32>
    }
    %c20_i32_18 = arith.constant 20 : i32
    %62 = tpu.iota {dimensions = array<i32: 0>} : vector<2x16xi32>
    %63 = tpu.iota {dimensions = array<i32: 1>} : vector<2x16xi32>
    %c8_i32_19 = arith.constant 8 : i32
    %64 = vector.broadcast %c8_i32_19 : i32 to vector<2x16xi32>
    %65 = arith.muli %62, %64 : vector<2x16xi32>
    %c7_i32 = arith.constant 7 : i32
    %66 = vector.broadcast %c7_i32 : i32 to vector<2x16xi32>
    %67 = arith.addi %65, %66 : vector<2x16xi32>
    %68 = arith.cmpi eq, %63, %67 : vector<2x16xi32>
    %69 = arith.extui %68 : vector<2x16xi1> to vector<2x16xi32>
    %70 = arith.sitofp %69 : vector<2x16xi32> to vector<2x16xf32>
    %cst_20 = arith.constant dense<0.000000e+00> : vector<2x128xf32>
    %71 = tpu.matmul %70, %61, %cst_20 {dimension_numbers = #tpu.dot_dimension_numbers<[1], [0], [0], [1], [0, 0, 1, 1], [], []>} : vector<2x16xf32>, vector<16x128xf32>, vector<2x128xf32> -> vector<2x128xf32>
    %c0_21 = arith.constant 0 : index
    %c0_22 = arith.constant 0 : index
    %72 = vector.load %arg8[%c0_21, %c0_22] : memref<1x128xf32, #tpu.memory_space<vmem>>, vector<1x128xf32>
    %73 = arith.mulf %71, %71 : vector<2x128xf32>
    %cst_23 = arith.constant dense<0.000000e+00> : vector<2xf32>
    %74 = vector.multi_reduction <add>, %73, %cst_23 [1] : vector<2x128xf32> to vector<2xf32>
    %75 = vector.shape_cast %74 : vector<2xf32> to vector<2x1xf32>
    %cst_24 = arith.constant 3.125000e-02 : f32
    %76 = vector.broadcast %cst_24 : f32 to vector<2x1xf32>
    %77 = arith.mulf %75, %76 : vector<2x1xf32>
    %cst_25 = arith.constant 9.99999997E-7 : f32
    %78 = vector.broadcast %cst_25 : f32 to vector<2x1xf32>
    %79 = arith.addf %77, %78 : vector<2x1xf32>
    %80 = math.rsqrt %79 : vector<2x1xf32>
    %81 = vector.broadcast %80 : vector<2x1xf32> to vector<2x128xf32>
    %82 = arith.mulf %71, %81 : vector<2x128xf32>
    %83 = vector.broadcast %72 : vector<1x128xf32> to vector<2x128xf32>
    %84 = arith.mulf %82, %83 : vector<2x128xf32>
    %85 = tpu.iota {dimensions = array<i32: 1>} : vector<2x128xi32>
    %c32_i32 = arith.constant 32 : i32
    %86 = vector.broadcast %c32_i32 : i32 to vector<2x128xi32>
    %87 = arith.cmpi slt, %85, %86 : vector<2x128xi32>
    %cst_26 = arith.constant -1.000000e+30 : f32
    %88 = vector.broadcast %cst_26 : f32 to vector<2x128xf32>
    %89 = arith.select %87, %84, %88 : vector<2x128xi1>, vector<2x128xf32>
    %cst_27 = arith.constant dense<0xFF800000> : vector<2xf32>
    %90 = vector.multi_reduction <maximumf>, %89, %cst_27 [1] : vector<2x128xf32> to vector<2xf32>
    %91 = vector.shape_cast %90 : vector<2xf32> to vector<2x1xf32>
    %92 = vector.broadcast %91 : vector<2x1xf32> to vector<2x128xf32>
    %93 = arith.cmpf oge, %89, %92 : vector<2x128xf32>
    %94 = arith.andi %93, %87 : vector<2x128xi1>
    %c128_i32 = arith.constant 128 : i32
    %95 = vector.broadcast %c128_i32 : i32 to vector<2x128xi32>
    %96 = arith.select %94, %85, %95 : vector<2x128xi1>, vector<2x128xi32>
    %cst_28 = arith.constant dense<2147483647> : vector<2xi32>
    %97 = vector.multi_reduction <minsi>, %96, %cst_28 [1] : vector<2x128xi32> to vector<2xi32>
    %98 = vector.shape_cast %97 : vector<2xi32> to vector<2x1xi32>
    %c0_29 = arith.constant 0 : index
    %c0_30 = arith.constant 0 : index
    %99 = vector.load %arg11[%c0_29, %c0_30] : memref<2x1xi32, #tpu.memory_space<vmem>>, vector<2x1xi32>
    tpu.vector_store %arg11[%c0_29, %c0_30], %98 {strides = array<i32>} : memref<2x1xi32, #tpu.memory_space<vmem>>, vector<2x1xi32>,
    return
  }
}

</mosaic_0001>

<llo_original>
// kernel: tpu_custom_call.1
$region0: #{tpu_custom_call.1}
  #allocation0 [shape = 'u32[]', space=smem, size = 0x4, offset = 0x4, fixed_abs, tag = 'smem constant byte address 0x4 - core index']
  #allocation1 [shape = 'u32[144,128]{1,0:T(1,128)}', space=vmem, size = 0x12000, scoped, tag = 'internal scratch']
  %s0 = inlined_call_operand.vmem [shape: s32[16,1], index: 0, kind: input, shape index: {}]
  %s1 = inlined_call_operand.hbm [shape: bf16[64,128], index: 1, kind: input, shape index: {}]
  %s2 = inlined_call_operand.hbm [shape: bf16[20,128,384], index: 2, kind: input, shape index: {}]
  %s3 = inlined_call_operand.hbm [shape: bf16[20,128,128], index: 3, kind: input, shape index: {}]
  %s4 = inlined_call_operand.hbm [shape: bf16[20,128,256], index: 4, kind: input, shape index: {}]
  %s5 = inlined_call_operand.hbm [shape: bf16[20,128,128], index: 5, kind: input, shape index: {}]
  %s6 = inlined_call_operand.hbm [shape: f32[20,1,128], index: 6, kind: input, shape index: {}]
  %s7 = inlined_call_operand.hbm [shape: f32[20,1,128], index: 7, kind: input, shape index: {}]
  %s8 = inlined_call_operand.hbm [shape: f32[1,128], index: 8, kind: input, shape index: {}]
  %s9 = inlined_call_operand.hbm [shape: f32[16,128], index: 9, kind: input, shape index: {}]
  %s10 = inlined_call_operand.hbm [shape: f32[16,128], index: 10, kind: input, shape index: {}]
  %s11 = inlined_call_operand.vmem [shape: s32[2,1], index: 11, kind: output, shape index: {}]
  %s12 = sld [smem:[#allocation0]]
  $region101: #{tpu_custom_call.1} parent=0
    _
  %s14 = ssub.s32 1, %s12
  %s15 = scalar_select 0, %s14, %s12
  $region1: #{tpu_custom_call.1} parent=0
    #allocation2 [shape = 'u8[16384]{0}', space=vmem, size = 0x4000, scoped, tag = 'input window, operand 1, single buffered']
    #allocation3 [shape = 's32[1]{0}', space=sflag, size = 0x4, scoped, tag = 'scoped memory for tpu_custom_call.1']
    #allocation4 [shape = 'u8[1966080]{0}', space=vmem, size = 0x1e0000, scoped, tag = 'input window, operand 2, single buffered']
    #allocation5 [shape = 's32[1]{0}', space=sflag, size = 0x4, scoped, tag = 'scoped memory for tpu_custom_call.1']
    #allocation6 [shape = 'u8[655360]{0}', space=vmem, size = 0xa0000, scoped, tag = 'input window, operand 3, single buffered']
    #allocation7 [shape = 'u8[1310720]{0}', space=vmem, size = 0x140000, scoped, tag = 'input window, operand 4, single buffered']
    #allocation8 [shape = 's32[1]{0}', space=sflag, size = 0x4, scoped, tag = 'scoped memory for tpu_custom_call.1']
    #allocation9 [shape = 'u8[655360]{0}', space=vmem, size = 0xa0000, scoped, tag = 'input window, operand 5, single buffered']
    #allocation10 [shape = 'u8[10240]{0}', space=vmem, size = 0x2800, scoped, tag = 'input window, operand 6, single buffered']
    #allocation11 [shape = 's32[1]{0}', space=sflag, size = 0x4, scoped, tag = 'scoped memory for tpu_custom_call.1']
    #allocation12 [shape = 'u8[10240]{0}', space=vmem, size = 0x2800, scoped, tag = 'input window, operand 7, single buffered']
    #allocation13 [shape = 'u8[512]{0}', space=vmem, size = 0x400, scoped, tag = 'input window, operand 8, single buffered']
    #allocation14 [shape = 's32[1]{0}', space=sflag, size = 0x4, scoped, tag = 'scoped memory for tpu_custom_call.1']
    #allocation15 [shape = 'u8[8192]{0}', space=vmem, size = 0x2000, scoped, tag = 'input window, operand 9, single buffered']
    #allocation16 [shape = 'u8[8192]{0}', space=vmem, size = 0x2000, scoped, tag = 'input window, operand 10, single buffered']
    #allocation17 [shape = 's32[1]{0}', space=sflag, size = 0x4, scoped, tag = 'scoped memory for tpu_custom_call.1']
    %16 = vsyncpa [#allocation3], 0
    %17 = vsyncpa [#allocation5], 0
    %18 = vsyncpa [#allocation8], 0
    %19 = vsyncpa [#allocation11], 0
    %20 = vsyncpa [#allocation14], 0
    %21 = vsyncpa [#allocation17], 0
    // Predicated region
    $region2: #{tpu_custom_call.1} parent=1 // pred_check
      _
    $region3: #{tpu_custom_call.1} parent=1 // pred_check_branch
      %23 = sbr.rel (0) target = $region5
    $region4: #{tpu_custom_call.1} parent=1 // pred_region
      _
    $region5: #{tpu_custom_call.1} parent=1 // pred_fallthru
      _
    // Predicated region
    $region6: #{tpu_custom_call.1} parent=1 // pred_check
      _
    $region7: #{tpu_custom_call.1} parent=1 // pred_check_branch
      %25 = sbr.rel (0) target = $region9
    $region8: #{tpu_custom_call.1} parent=1 // pred_region
      %s27 = ssub.s32 512, 512
      %28 = vsyncadd [#allocation3], %s27
      %s29 = sshll.u32 [#allocation2], 4
      %s30 = int_to_ptr.vmem [resolvable:$true] %s29
      %35 = dma.hbm_to_vmem [thread:$0]  %s1, 512, %s30, [#allocation3], 64, 64, 4
    $region9: #{tpu_custom_call.1} parent=1 // pred_fallthru
      _
    // Predicated region
    $region10: #{tpu_custom_call.1} parent=1 // pred_check
      _
    $region11: #{tpu_custom_call.1} parent=1 // pred_check_branch
      %37 = sbr.rel (0) target = $region13
    $region12: #{tpu_custom_call.1} parent=1 // pred_region
      %s39 = ssub.s32 61440, 61440
      %40 = vsyncadd [#allocation5], %s39
      %s41 = sshll.u32 [#allocation4], 4
      %s42 = int_to_ptr.vmem [resolvable:$true] %s41
      %47 = dma.hbm_to_vmem [thread:$0]  %s2, 61440, %s42, [#allocation5], 192, 192, 12
    $region13: #{tpu_custom_call.1} parent=1 // pred_fallthru
      _
    // Predicated region
    $region14: #{tpu_custom_call.1} parent=1 // pred_check
      _
    $region15: #{tpu_custom_call.1} parent=1 // pred_check_branch
      %49 = sbr.rel (0) target = $region17
    $region16: #{tpu_custom_call.1} parent=1 // pred_region
      %s51 = ssub.s32 20480, 20480
      %52 = vsyncadd [#allocation5], %s51
      %s53 = sshll.u32 [#allocation6], 4
      %s54 = int_to_ptr.vmem [resolvable:$true] %s53
      %59 = dma.hbm_to_vmem [thread:$0]  %s3, 20480, %s54, [#allocation5], 64, 64, 4
    $region17: #{tpu_custom_call.1} parent=1 // pred_fallthru
      _
    // Predicated region
    $region18: #{tpu_custom_call.1} parent=1 // pred_check
      _
    $region19: #{tpu_custom_call.1} parent=1 // pred_check_branch
      %61 = sbr.rel (0) target = $region21
    $region20: #{tpu_custom_call.1} parent=1 // pred_region
      %s63 = ssub.s32 40960, 40960
      %64 = vsyncadd [#allocation8], %s63
      %s65 = sshll.u32 [#allocation7], 4
      %s66 = int_to_ptr.vmem [resolvable:$true] %s65
      %71 = dma.hbm_to_vmem [thread:$0]  %s4, 40960, %s66, [#allocation8], 128, 128, 8
    $region21: #{tpu_custom_call.1} parent=1 // pred_fallthru
      _
    // Predicated region
    $region22: #{tpu_custom_call.1} parent=1 // pred_check
      _
    $region23: #{tpu_custom_call.1} parent=1 // pred_check_branch
      %73 = sbr.rel (0) target = $region25
    $region24: #{tpu_custom_call.1} parent=1 // pred_region
      %s75 = ssub.s32 20480, 20480
      %76 = vsyncadd [#allocation8], %s75
      %s77 = sshll.u32 [#allocation9], 4
      %s78 = int_to_ptr.vmem [resolvable:$true] %s77
      %83 = dma.hbm_to_vmem [thread:$0]  %s5, 20480, %s78, [#allocation8], 64, 64, 4
    $region25: #{tpu_custom_call.1} parent=1 // pred_fallthru
      _
    // Predicated region
    $region26: #{tpu_custom_call.1} parent=1 // pred_check
      _
    $region27: #{tpu_custom_call.1} parent=1 // pred_check_branch
      %85 = sbr.rel (0) target = $region29
    $region28: #{tpu_custom_call.1} parent=1 // pred_region
      %s87 = ssub.s32 320, 320
      %88 = vsyncadd [#allocation11], %s87
      %s89 = sshll.u32 [#allocation10], 4
      %s90 = int_to_ptr.vmem [resolvable:$true] %s89
      %95 = dma.hbm_to_vmem [thread:$0]  %s6, 320, %s90, [#allocation11], 16, 16, 1
    $region29: #{tpu_custom_call.1} parent=1 // pred_fallthru
      _
    // Predicated region
    $region30: #{tpu_custom_call.1} parent=1 // pred_check
      _
    $region31: #{tpu_custom_call.1} parent=1 // pred_check_branch
      %97 = sbr.rel (0) target = $region33
    $region32: #{tpu_custom_call.1} parent=1 // pred_region
      %s99 = ssub.s32 320, 320
      %100 = vsyncadd [#allocation11], %s99
      %s101 = sshll.u32 [#allocation12], 4
      %s102 = int_to_ptr.vmem [resolvable:$true] %s101
      %107 = dma.hbm_to_vmem [thread:$0]  %s7, 320, %s102, [#allocation11], 16, 16, 1
    $region33: #{tpu_custom_call.1} parent=1 // pred_fallthru
      _
    // Predicated region
    $region34: #{tpu_custom_call.1} parent=1 // pred_check
      _
    $region35: #{tpu_custom_call.1} parent=1 // pred_check_branch
      %109 = sbr.rel (0) target = $region37
    $region36: #{tpu_custom_call.1} parent=1 // pred_region
      %s111 = ssub.s32 16, 16
      %112 = vsyncadd [#allocation14], %s111
      %s114 = sshll.u32 [#allocation13], 4
      %s115 = int_to_ptr.vmem [resolvable:$true] %s114
      %117 = dma.hbm_to_vmem [thread:$0]  %s8, 16, %s115, [#allocation14]
    $region37: #{tpu_custom_call.1} parent=1 // pred_fallthru
      _
    // Predicated region
    $region38: #{tpu_custom_call.1} parent=1 // pred_check
      _
    $region39: #{tpu_custom_call.1} parent=1 // pred_check_branch
      %119 = sbr.rel (0) target = $region41
    $region40: #{tpu_custom_call.1} parent=1 // pred_region
      %s121 = ssub.s32 256, 256
      %122 = vsyncadd [#allocation14], %s121
      %s123 = sshll.u32 [#allocation15], 4
      %s124 = int_to_ptr.vmem [resolvable:$true] %s123
      %129 = dma.hbm_to_vmem [thread:$0]  %s9, 256, %s124, [#allocation14], 128, 128, 8
    $region41: #{tpu_custom_call.1} parent=1 // pred_fallthru
      _
    // Predicated region
    $region42: #{tpu_custom_call.1} parent=1 // pred_check
      _
    $region43: #{tpu_custom_call.1} parent=1 // pred_check_branch
      %131 = sbr.rel (0) target = $region45
    $region44: #{tpu_custom_call.1} parent=1 // pred_region
      %s133 = ssub.s32 256, 256
      %134 = vsyncadd [#allocation17], %s133
      %s135 = sshll.u32 [#allocation16], 4
      %s136 = int_to_ptr.vmem [resolvable:$true] %s135
      %141 = dma.hbm_to_vmem [thread:$0]  %s10, 256, %s136, [#allocation17], 128, 128, 8
    $region45: #{tpu_custom_call.1} parent=1 // pred_fallthru
      _
    // Predicated region
    $region46: #{tpu_custom_call.1} parent=1 // pred_check
      _
    $region47: #{tpu_custom_call.1} parent=1 // pred_check_branch
      %143 = sbr.rel (0) target = $region49
    $region48: #{tpu_custom_call.1} parent=1 // pred_region
      %144 = dma.done [#allocation3], 512
    $region49: #{tpu_custom_call.1} parent=1 // pred_fallthru
      _
    // Predicated region
    $region50: #{tpu_custom_call.1} parent=1 // pred_check
      _
    $region51: #{tpu_custom_call.1} parent=1 // pred_check_branch
      %146 = sbr.rel (0) target = $region53
    $region52: #{tpu_custom_call.1} parent=1 // pred_region
      %147 = dma.done [#allocation5], 61440
    $region53: #{tpu_custom_call.1} parent=1 // pred_fallthru
      _
    // Predicated region
    $region54: #{tpu_custom_call.1} parent=1 // pred_check
      _
    $region55: #{tpu_custom_call.1} parent=1 // pred_check_branch
      %149 = sbr.rel (0) target = $region57
    $region56: #{tpu_custom_call.1} parent=1 // pred_region
      %150 = dma.done [#allocation5], 20480
    $region57: #{tpu_custom_call.1} parent=1 // pred_fallthru
      _
    // Predicated region
    $region58: #{tpu_custom_call.1} parent=1 // pred_check
      _
    $region59: #{tpu_custom_call.1} parent=1 // pred_check_branch
      %152 = sbr.rel (0) target = $region61
    $region60: #{tpu_custom_call.1} parent=1 // pred_region
      %153 = dma.done [#allocation8], 40960
    $region61: #{tpu_custom_call.1} parent=1 // pred_fallthru
      _
    // Predicated region
    $region62: #{tpu_custom_call.1} parent=1 // pred_check
      _
    $region63: #{tpu_custom_call.1} parent=1 // pred_check_branch
      %155 = sbr.rel (0) target = $region65
    $region64: #{tpu_custom_call.1} parent=1 // pred_region
      %156 = dma.done [#allocation8], 20480
    $region65: #{tpu_custom_call.1} parent=1 // pred_fallthru
      _
    // Predicated region
    $region66: #{tpu_custom_call.1} parent=1 // pred_check
      _
    $region67: #{tpu_custom_call.1} parent=1 // pred_check_branch
      %158 = sbr.rel (0) target = $region69
    $region68: #{tpu_custom_call.1} parent=1 // pred_region
      %159 = dma.done [#allocation11], 320
    $region69: #{tpu_custom_call.1} parent=1 // pred_fallthru
      _
    // Predicated region
    $region70: #{tpu_custom_call.1} parent=1 // pred_check
      _
    $region71: #{tpu_custom_call.1} parent=1 // pred_check_branch
      %161 = sbr.rel (0) target = $region73
    $region72: #{tpu_custom_call.1} parent=1 // pred_region
      %162 = dma.done [#allocation11], 320
    $region73: #{tpu_custom_call.1} parent=1 // pred_fallthru
      _
    // Predicated region
    $region74: #{tpu_custom_call.1} parent=1 // pred_check
      _
    $region75: #{tpu_custom_call.1} parent=1 // pred_check_branch
      %164 = sbr.rel (0) target = $region77
    $region76: #{tpu_custom_call.1} parent=1 // pred_region
      %165 = dma.done [#allocation14], 16
    $region77: #{tpu_custom_call.1} parent=1 // pred_fallthru
      _
    // Predicated region
    $region78: #{tpu_custom_call.1} parent=1 // pred_check
      _
    $region79: #{tpu_custom_call.1} parent=1 // pred_check_branch
      %167 = sbr.rel (0) target = $region81
    $region80: #{tpu_custom_call.1} parent=1 // pred_region
      %168 = dma.done [#allocation14], 256
    $region81: #{tpu_custom_call.1} parent=1 // pred_fallthru
      _
    // Predicated region
    $region82: #{tpu_custom_call.1} parent=1 // pred_check
      _
    $region83: #{tpu_custom_call.1} parent=1 // pred_check_branch
      %170 = sbr.rel (0) target = $region85
    $region84: #{tpu_custom_call.1} parent=1 // pred_region
      %171 = dma.done [#allocation17], 256
    $region85: #{tpu_custom_call.1} parent=1 // pred_fallthru
      _
    %v173 = vld [vmem:[%s0] sm:$0xff]
    %v174 = vld [vmem:[%s0 + $0x8] sm:$0xff]
    %v175 = vlaneseq
    %v176 = vand.u32 %v175, 127
    %177 = vset.pattern.permute.xlu0 0
    %178 = vperm.xlu0 %177, %v173
    %v179 = vpop.permute.xlu0 %178
    %180 = vset.pattern.permute.xlu0 0
    %181 = vperm.xlu0 %180, %v174
    %v182 = vpop.permute.xlu0 %181
    %vm183 = vcmp.eq.s32.totalorder %v176, %v179
    %vm184 = vcmp.eq.s32.totalorder %v176, %v182
    %v185 = vsel %vm183, 1, 0
    %v186 = vsel %vm184, 1, 0
    %v187 = vcvt.s32.f32 %v185
    %v188 = vcvt.s32.f32 %v186
    %v189 = vpack.c.bf16 %v188, %v187
    %v190 = vld [vmem:[#allocation2] sm:$0xf]
    %v191 = vld [vmem:[#allocation2 + $0x4] sm:$0xf]
    %v192 = vld [vmem:[#allocation2 + $0x8] sm:$0xf]
    %v193 = vld [vmem:[#allocation2 + $0xc] sm:$0xf]
    %v194 = vld [vmem:[#allocation2 + $0x10] sm:$0xf]
    %v195 = vld [vmem:[#allocation2 + $0x14] sm:$0xf]
    %v196 = vld [vmem:[#allocation2 + $0x18] sm:$0xf]
    %v197 = vld [vmem:[#allocation2 + $0x1c] sm:$0xf]
    %v206 = vunpack.c.l.b16 %v190
    %v207 = vunpack.c.l.b16 %v191
    %v208 = vunpack.c.l.b16 %v192
    %v209 = vunpack.c.l.b16 %v193
    %v210 = vunpack.c.l.b16 %v194
    %v211 = vunpack.c.l.b16 %v195
    %v212 = vunpack.c.l.b16 %v196
    %v213 = vunpack.c.l.b16 %v197
    %v214 = vpack.c.b16 %v207, %v206
    %v215 = vpack.c.b16 %v209, %v208
    %v216 = vpack.c.b16 %v211, %v210
    %v217 = vpack.c.b16 %v213, %v212
    %vm222 = vcmask 523264
    %v224 = vsel %vm222, %v189, 0
    %226 = vmatprep.subr.bf16.mxu0 0
    %227 = vmatpush1.bf16.msra.mxu0 %v214
    %228 = vmatprep.subr.bf16.mxu0 0
    %229 = vmatpush1.bf16.msra.mxu0 %v215
    %230 = vmatprep.subr.bf16.mxu0 0
    %231 = vmatpush1.bf16.msra.mxu0 %v216
    %232 = vmatprep.subr.bf16.mxu0 0
    %233 = vmatpush1.bf16.msra.mxu0 %v217
    %234 = vmatprep.subr.bf16.mxu0 0
    %235 = vmatpush1.bf16.msra.mxu0 0
    %236 = vmatprep.subr.bf16.mxu0 0
    %237 = vmatpush1.bf16.msra.mxu0 0
    %238 = vmatprep.subr.bf16.mxu0 0
    %239 = vmatpush1.bf16.msra.mxu0 0
    %240 = vmatprep.subr.bf16.mxu0 0
    %241 = vmatpush1.bf16.msra.mxu0 0
    %242 = vmatprep.subr.bf16.mxu0 0
    %243 = vmatpush1.bf16.msra.mxu0 0
    %244 = vmatprep.subr.bf16.mxu0 0
    %245 = vmatpush1.bf16.msra.mxu0 0
    %246 = vmatprep.subr.bf16.mxu0 0
    %247 = vmatpush1.bf16.msra.mxu0 0
    %248 = vmatprep.subr.bf16.mxu0 0
    %249 = vmatpush1.bf16.msra.mxu0 0
    %250 = vmatprep.subr.bf16.mxu0 0
    %251 = vmatpush1.bf16.msra.mxu0 0
    %252 = vmatprep.subr.bf16.mxu0 0
    %253 = vmatpush1.bf16.msra.mxu0 0
    %254 = vmatprep.subr.bf16.mxu0 0
    %255 = vmatpush1.bf16.msra.mxu0 0
    %256 = vmatprep.subr.bf16.mxu0 0
    %257 = vmatpush1.bf16.msra.mxu0 0
    %258 = vmatprep.mubr.bf16.mxu0 0
    %259 = vmatmul.mubr.bf16.gmra.mrb[0].mxu0 %v224
    %v260 = vpop.f32.mrb[0].mxu0
    %v261 = vadd.f32 0.0, %v260
    %v262 = vpop.f32.mrb[0].mxu0
    %v263 = vpop.f32.mrb[0].mxu0
    %v264 = vadd.f32 0.0, %v263
    %v265 = vpop.f32.mrb[0].mxu0
    %266 = vdwg.mxu0
    %v267 = vld [vmem:[#allocation15] sm:$0xff]
    %v268 = vld [vmem:[#allocation15 + $0x8] sm:$0xff]
    %v269 = vld [vmem:[#allocation16] sm:$0xff]
    %v270 = vld [vmem:[#allocation16 + $0x8] sm:$0xff]
    %v271 = vlaneseq
    %v272 = vshrl.u32 %v271, 7
    %v273 = vmul.u32 %v272, 4
    %vm274 = vcmp.ge.s32.totalorder %v176, %v273
    %v275 = vadd.s32 %v273, 4
    %vm276 = vcmp.lt.s32.totalorder %v176, %v275
    %vm277 = vmand %vm274, %vm276
    %v278 = vadd.s32 %v273, 64
    %vm279 = vcmp.ge.s32.totalorder %v176, %v278
    %v280 = vadd.s32 %v278, 4
    %vm281 = vcmp.lt.s32.totalorder %v176, %v280
    %vm282 = vmand %vm279, %vm281
    %vm283 = vmor %vm277, %vm282
    %v284 = vsel %vm283, 1.0, 0.0
    %v287 = vunpack.c.l.s4 1966171168
    %v288 = vunpack.c.0.s8 %v287
    %v289 = vlaneseq
    %v290 = vshrl.u32 %v289, 7
    %v291 = vsub.s32 %v288, %v290
    %v292 = vrot.slane %v284, %v291
    %v293 = vcombine.high %v292, %v292
    %v295 = vunpack.c.l.s4 1966171168
    %v296 = vunpack.c.0.s8 %v295
    %v297 = vlaneseq
    %v298 = vshrl.u32 %v297, 7
    %v299 = vsub.s32 %v296, %v298
    %v300 = vrot.slane %v292, %v299
    %v302 = vunpack.c.l.s4 1966171168
    %v303 = vunpack.c.0.s8 %v302
    %v304 = vlaneseq
    %v305 = vshrl.u32 %v304, 7
    %v306 = vsub.s32 %v303, %v305
    %v307 = vrot.slane %v293, %v306
    %v308 = vcombine.high %v300, %v300
    %v309 = vcombine.high %v307, %v307
    %v310 = vadd.s32 %v272, 8
    %vm311 = vcmp.le.s32.totalorder %v176, %v272
    %vm312 = vcmp.le.s32.totalorder %v176, %v310
    %vm313 = vcmp.lt.s32.totalorder %v272, 16
    %vm314 = vcmp.lt.s32.totalorder %v310, 16
    %vm315 = vmand %vm311, %vm313
    %vm316 = vmand %vm312, %vm314
    %vm317 = vcmp.ge.s32.totalorder %v272, 0
    %vm318 = vcmp.ge.s32.totalorder %v310, 0
    %vm319 = vcmp.lt.s32.totalorder %v272, 8
    %vm320 = vcmp.lt.s32.totalorder %v310, 8
    %vm321 = vmand %vm317, %vm319
    %vm322 = vmand %vm318, %vm320
    %vm323 = vcmp.ge.s32.totalorder %v176, 0
    %vm324 = vmand %vm321, %vm323
    %vm325 = vmand %vm322, %vm323
    %vm326 = vcmp.ge.s32.totalorder %v272, 8
    %vm327 = vcmp.ge.s32.totalorder %v310, 8
    %vm328 = vmand %vm326, %vm313
    %vm329 = vmand %vm327, %vm314
    %vm330 = vcmp.ge.s32.totalorder %v176, 8
    %vm331 = vmand %vm328, %vm330
    %vm332 = vmand %vm329, %vm330
    %vm333 = vmor %vm324, %vm331
    %vm334 = vmor %vm325, %vm332
    %vm335 = vmand %vm315, %vm333
    %vm336 = vmand %vm316, %vm334
    %v337 = vsel %vm335, 0.0, -1e+30
    %v338 = vsel %vm336, 0.0, -1e+30
    loop: start=0, step=1, limit=20
    $region86: #{tpu_custom_call.1} parent=1 // loop_pre_header
      _
    $region87: #{tpu_custom_call.1} parent=1 // loop_header
      %s340 = sphi 0, %s344
      %p341 = scmp.ge.s32.totalorder %s340, 20
      %v345 = vphi %v261, %v1537
      %v346 = vphi %v264, %v1538
    $region88: #{tpu_custom_call.1} parent=1 // loop_header_branch
      %343 = sbr.rel (%p341) target = $region92
    $region89: #{tpu_custom_call.1} parent=1 // loop_body
      %s347 = scalar_lea.vmem [#allocation10], %s340
      %v348 = vld [vmem:[%s347] sm:$0x1]
      %v349 = vmul.f32 %v345, %v345
      %v350 = vmul.f32 %v346, %v346
      %351 = vadd.xlane.f32.xlu0 %v349
      %v352 = vpop.xlane.xlu0 %351
      %353 = vadd.xlane.f32.xlu0 %v350
      %v354 = vpop.xlane.xlu0 %353
      %v355 = vmul.f32 %v352, 0.03125
      %v356 = vmul.f32 %v354, 0.03125
      %v357 = vadd.f32 %v355, 1e-06
      %v358 = vadd.f32 %v356, 1e-06
      %v359 = vrsqrt.pop %v357
      %v360 = vrsqrt.pop %v358
      %v361 = vmul.f32 %v345, %v359
      %v362 = vmul.f32 %v346, %v360
      %v364 = vlaneseq
      %v365 = vshrl.u32 %v364, 7
      %v366 = vsub.s32 0, %v365
      %v367 = vrot.slane %v348, %v366
      %v369 = vmul.f32 %v361, %v367
      %v370 = vmul.f32 %v362, %v367
      %v371 = vpack.c.bf16 %v370, %v369
      %s372 = smul.u32 %s340, 48
      %s373 = smul.addr %s372, 4
      %s374 = scalar_lea.vmem [#allocation4], %s373
      %v375 = vld [vmem:[%s374] sm:$0xff]
      %v376 = vld [vmem:[%s374 + $0x8] sm:$0xf]
      %v377 = vld [vmem:[%s374 + $0xc] sm:$0xff]
      %v378 = vld [vmem:[%s374 + $0x14] sm:$0xf]
      %v379 = vld [vmem:[%s374 + $0x18] sm:$0xff]
      %v380 = vld [vmem:[%s374 + $0x20] sm:$0xf]
      %v381 = vld [vmem:[%s374 + $0x24] sm:$0xff]
      %v382 = vld [vmem:[%s374 + $0x2c] sm:$0xf]
      %v383 = vld [vmem:[%s374 + $0x30] sm:$0xff]
      %v384 = vld [vmem:[%s374 + $0x38] sm:$0xf]
      %v385 = vld [vmem:[%s374 + $0x3c] sm:$0xff]
      %v386 = vld [vmem:[%s374 + $0x44] sm:$0xf]
      %v387 = vld [vmem:[%s374 + $0x48] sm:$0xff]
      %v388 = vld [vmem:[%s374 + $0x50] sm:$0xf]
      %v389 = vld [vmem:[%s374 + $0x54] sm:$0xff]
      %v390 = vld [vmem:[%s374 + $0x5c] sm:$0xf]
      %v391 = vld [vmem:[%s374 + $0x60] sm:$0xff]
      %v392 = vld [vmem:[%s374 + $0x68] sm:$0xf]
      %v393 = vld [vmem:[%s374 + $0x6c] sm:$0xff]
      %v394 = vld [vmem:[%s374 + $0x74] sm:$0xf]
      %v395 = vld [vmem:[%s374 + $0x78] sm:$0xff]
      %v396 = vld [vmem:[%s374 + $0x80] sm:$0xf]
      %v397 = vld [vmem:[%s374 + $0x84] sm:$0xff]
      %v398 = vld [vmem:[%s374 + $0x8c] sm:$0xf]
      %v399 = vld [vmem:[%s374 + $0x90] sm:$0xff]
      %v400 = vld [vmem:[%s374 + $0x98] sm:$0xf]
      %v401 = vld [vmem:[%s374 + $0x9c] sm:$0xff]
      %v402 = vld [vmem:[%s374 + $0xa4] sm:$0xf]
      %v403 = vld [vmem:[%s374 + $0xa8] sm:$0xff]
      %v404 = vld [vmem:[%s374 + $0xb0] sm:$0xf]
      %v405 = vld [vmem:[%s374 + $0xb4] sm:$0xff]
      %v406 = vld [vmem:[%s374 + $0xbc] sm:$0xf]
      %v439 = vunpack.c.l.b16 %v375
      %v440 = vunpack.c.h.b16 %v375
      %v441 = vunpack.c.l.b16 %v376
      %v442 = vunpack.c.l.b16 %v377
      %v443 = vunpack.c.h.b16 %v377
      %v444 = vunpack.c.l.b16 %v378
      %v445 = vunpack.c.l.b16 %v379
      %v446 = vunpack.c.h.b16 %v379
      %v447 = vunpack.c.l.b16 %v380
      %v448 = vunpack.c.l.b16 %v381
      %v449 = vunpack.c.h.b16 %v381
      %v450 = vunpack.c.l.b16 %v382
      %v451 = vunpack.c.l.b16 %v383
      %v452 = vunpack.c.h.b16 %v383
      %v453 = vunpack.c.l.b16 %v384
      %v454 = vunpack.c.l.b16 %v385
      %v455 = vunpack.c.h.b16 %v385
      %v456 = vunpack.c.l.b16 %v386
      %v457 = vunpack.c.l.b16 %v387
      %v458 = vunpack.c.h.b16 %v387
      %v459 = vunpack.c.l.b16 %v388
      %v460 = vunpack.c.l.b16 %v389
      %v461 = vunpack.c.h.b16 %v389
      %v462 = vunpack.c.l.b16 %v390
      %v463 = vunpack.c.l.b16 %v391
      %v464 = vunpack.c.h.b16 %v391
      %v465 = vunpack.c.l.b16 %v392
      %v466 = vunpack.c.l.b16 %v393
      %v467 = vunpack.c.h.b16 %v393
      %v468 = vunpack.c.l.b16 %v394
      %v469 = vunpack.c.l.b16 %v395
      %v470 = vunpack.c.h.b16 %v395
      %v471 = vunpack.c.l.b16 %v396
      %v472 = vunpack.c.l.b16 %v397
      %v473 = vunpack.c.h.b16 %v397
      %v474 = vunpack.c.l.b16 %v398
      %v475 = vunpack.c.l.b16 %v399
      %v476 = vunpack.c.h.b16 %v399
      %v477 = vunpack.c.l.b16 %v400
      %v478 = vunpack.c.l.b16 %v401
      %v479 = vunpack.c.h.b16 %v401
      %v480 = vunpack.c.l.b16 %v402
      %v481 = vunpack.c.l.b16 %v403
      %v482 = vunpack.c.h.b16 %v403
      %v483 = vunpack.c.l.b16 %v404
      %v484 = vunpack.c.l.b16 %v405
      %v485 = vunpack.c.h.b16 %v405
      %v486 = vunpack.c.l.b16 %v406
      %v487 = vpack.c.b16 %v442, %v439
      %v488 = vpack.c.b16 %v443, %v440
      %v489 = vpack.c.b16 %v444, %v441
      %v490 = vpack.c.b16 %v448, %v445
      %v491 = vpack.c.b16 %v449, %v446
      %v492 = vpack.c.b16 %v450, %v447
      %v493 = vpack.c.b16 %v454, %v451
      %v494 = vpack.c.b16 %v455, %v452
      %v495 = vpack.c.b16 %v456, %v453
      %v496 = vpack.c.b16 %v460, %v457
      %v497 = vpack.c.b16 %v461, %v458
      %v498 = vpack.c.b16 %v462, %v459
      %v499 = vpack.c.b16 %v466, %v463
      %v500 = vpack.c.b16 %v467, %v464
      %v501 = vpack.c.b16 %v468, %v465
      %v502 = vpack.c.b16 %v472, %v469
      %v503 = vpack.c.b16 %v473, %v470
      %v504 = vpack.c.b16 %v474, %v471
      %v505 = vpack.c.b16 %v478, %v475
      %v506 = vpack.c.b16 %v479, %v476
      %v507 = vpack.c.b16 %v480, %v477
      %v508 = vpack.c.b16 %v484, %v481
      %v509 = vpack.c.b16 %v485, %v482
      %v510 = vpack.c.b16 %v486, %v483
      %535 = vmatprep.subr.bf16.mxu0 %v488
      %536 = vmatpush1.bf16.msra.mxu0 %v487
      %537 = vmatprep.subr.bf16.mxu0 %v491
      %538 = vmatpush1.bf16.msra.mxu0 %v490
      %539 = vmatprep.subr.bf16.mxu0 %v494
      %540 = vmatpush1.bf16.msra.mxu0 %v493
      %541 = vmatprep.subr.bf16.mxu0 %v497
      %542 = vmatpush1.bf16.msra.mxu0 %v496
      %543 = vmatprep.subr.bf16.mxu0 %v500
      %544 = vmatpush1.bf16.msra.mxu0 %v499
      %545 = vmatprep.subr.bf16.mxu0 %v503
      %546 = vmatpush1.bf16.msra.mxu0 %v502
      %547 = vmatprep.subr.bf16.mxu0 %v506
      %548 = vmatpush1.bf16.msra.mxu0 %v505
      %549 = vmatprep.subr.bf16.mxu0 %v509
      %550 = vmatpush1.bf16.msra.mxu0 %v508
      %551 = vmatprep.subr.bf16.mxu0 0
      %552 = vmatpush1.bf16.msra.mxu0 0
      %553 = vmatprep.subr.bf16.mxu0 0
      %554 = vmatpush1.bf16.msra.mxu0 0
      %555 = vmatprep.subr.bf16.mxu0 0
      %556 = vmatpush1.bf16.msra.mxu0 0
      %557 = vmatprep.subr.bf16.mxu0 0
      %558 = vmatpush1.bf16.msra.mxu0 0
      %559 = vmatprep.subr.bf16.mxu0 0
      %560 = vmatpush1.bf16.msra.mxu0 0
      %561 = vmatprep.subr.bf16.mxu0 0
      %562 = vmatpush1.bf16.msra.mxu0 0
      %563 = vmatprep.subr.bf16.mxu0 0
      %564 = vmatpush1.bf16.msra.mxu0 0
      %565 = vmatprep.subr.bf16.mxu0 0
      %566 = vmatpush1.bf16.msra.mxu0 0
      %567 = vmatprep.mubr.bf16.mxu0 0
      %568 = vmatmul.mubr.bf16.gmra.mrb[0].mxu0 %v371
      %v569 = vpop.f32.mrb[0].mxu0
      %v570 = vadd.f32 0.0, %v569
      %v571 = vpop.f32.mrb[0].mxu0
      %v572 = vadd.f32 0.0, %v571
      %v573 = vpop.f32.mrb[0].mxu0
      %v574 = vadd.f32 0.0, %v573
      %v575 = vpop.f32.mrb[0].mxu0
      %v576 = vadd.f32 0.0, %v575
      %577 = vdwg.mxu0
      %578 = vmatprep.subr.bf16.mxu0 0
      %579 = vmatpush1.bf16.msra.mxu0 %v489
      %580 = vmatprep.subr.bf16.mxu0 0
      %581 = vmatpush1.bf16.msra.mxu0 %v492
      %582 = vmatprep.subr.bf16.mxu0 0
      %583 = vmatpush1.bf16.msra.mxu0 %v495
      %584 = vmatprep.subr.bf16.mxu0 0
      %585 = vmatpush1.bf16.msra.mxu0 %v498
      %586 = vmatprep.subr.bf16.mxu0 0
      %587 = vmatpush1.bf16.msra.mxu0 %v501
      %588 = vmatprep.subr.bf16.mxu0 0
      %589 = vmatpush1.bf16.msra.mxu0 %v504
      %590 = vmatprep.subr.bf16.mxu0 0
      %591 = vmatpush1.bf16.msra.mxu0 %v507
      %592 = vmatprep.subr.bf16.mxu0 0
      %593 = vmatpush1.bf16.msra.mxu0 %v510
      %594 = vmatprep.subr.bf16.mxu0 0
      %595 = vmatpush1.bf16.msra.mxu0 0
      %596 = vmatprep.subr.bf16.mxu0 0
      %597 = vmatpush1.bf16.msra.mxu0 0
      %598 = vmatprep.subr.bf16.mxu0 0
      %599 = vmatpush1.bf16.msra.mxu0 0
      %600 = vmatprep.subr.bf16.mxu0 0
      %601 = vmatpush1.bf16.msra.mxu0 0
      %602 = vmatprep.subr.bf16.mxu0 0
      %603 = vmatpush1.bf16.msra.mxu0 0
      %604 = vmatprep.subr.bf16.mxu0 0
      %605 = vmatpush1.bf16.msra.mxu0 0
      %606 = vmatprep.subr.bf16.mxu0 0
      %607 = vmatpush1.bf16.msra.mxu0 0
      %608 = vmatprep.subr.bf16.mxu0 0
      %609 = vmatpush1.bf16.msra.mxu0 0
      %610 = vmatprep.mubr.bf16.mxu0 0
      %611 = vmatmul.mubr.bf16.gmra.mrb[0].mxu0 %v371
      %v612 = vpop.f32.mrb[0].mxu0
      %v613 = vadd.f32 0.0, %v612
      %v614 = vpop.f32.mrb[0].mxu0
      %v615 = vpop.f32.mrb[0].mxu0
      %v616 = vadd.f32 0.0, %v615
      %v617 = vpop.f32.mrb[0].mxu0
      %618 = vdwg.mxu0
      %v619 = vmul.f32 %v570, %v267
      %v620 = vmul.f32 %v574, %v268
      %621 = vrot.lane.b32.xlu0 %v570, 64
      %v622 = vpop.permute.xlu0 %621
      %623 = vrot.lane.b32.xlu0 %v574, 64
      %v624 = vpop.permute.xlu0 %623
      %v625 = vmul.f32 %v622, %v269
      %v626 = vmul.f32 %v624, %v270
      %v627 = vadd.f32 %v619, %v625
      %v628 = vadd.f32 %v620, %v626
      %v629 = vmul.f32 %v572, %v267
      %v630 = vmul.f32 %v576, %v268
      %631 = vrot.lane.b32.xlu0 %v572, 64
      %v632 = vpop.permute.xlu0 %631
      %633 = vrot.lane.b32.xlu0 %v576, 64
      %v634 = vpop.permute.xlu0 %633
      %v635 = vmul.f32 %v632, %v269
      %v636 = vmul.f32 %v634, %v270
      %v637 = vadd.f32 %v629, %v635
      %v638 = vadd.f32 %v630, %v636
      %v639 = vlaneseq
      %v640 = vshrl.u32 %v639, 7
      %v641 = vsub.s32 0, %v640
      %v642 = vrot.slane %v300, %v641
      %v643 = vlaneseq
      %v644 = vshrl.u32 %v643, 7
      %v645 = vsub.s32 0, %v644
      %v646 = vrot.slane %v307, %v645
      %v647 = vlaneseq
      %v648 = vshrl.u32 %v647, 7
      %v649 = vsub.s32 0, %v648
      %v650 = vrot.slane %v308, %v649
      %v651 = vlaneseq
      %v652 = vshrl.u32 %v651, 7
      %v653 = vsub.s32 0, %v652
      %v654 = vrot.slane %v309, %v653
      %v659 = vmul.f32 %v627, %v642
      %v660 = vmul.f32 %v628, %v642
      %v661 = vmul.f32 %v627, %v646
      %v662 = vmul.f32 %v628, %v646
      %v663 = vmul.f32 %v627, %v650
      %v664 = vmul.f32 %v628, %v650
      %v665 = vmul.f32 %v627, %v654
      %v666 = vmul.f32 %v628, %v654
      %v667 = vpack.c.bf16 %v660, %v659
      %v668 = vpack.c.bf16 %v662, %v661
      %v669 = vpack.c.bf16 %v664, %v663
      %v670 = vpack.c.bf16 %v666, %v665
      %v671 = vpack.c.bf16 %v638, %v637
      %672 = vmatprep.subr.bf16.mxu0 0
      %673 = vmatpush1.bf16.xpose.msra.mxu0 %v671
      %674 = vmatprep.subr.bf16.mxu0 0
      %675 = vmatpush1.bf16.xpose.msra.mxu0 0
      %676 = vmatprep.subr.bf16.mxu0 0
      %677 = vmatpush1.bf16.xpose.msra.mxu0 0
      %678 = vmatprep.subr.bf16.mxu0 0
      %679 = vmatpush1.bf16.xpose.msra.mxu0 0
      %680 = vmatprep.subr.bf16.mxu0 0
      %681 = vmatpush1.bf16.xpose.msra.mxu0 0
      %682 = vmatprep.subr.bf16.mxu0 0
      %683 = vmatpush1.bf16.xpose.msra.mxu0 0
      %684 = vmatprep.subr.bf16.mxu0 0
      %685 = vmatpush1.bf16.xpose.msra.mxu0 0
      %686 = vmatprep.subr.bf16.mxu0 0
      %687 = vmatpush1.bf16.xpose.msra.mxu0 0
      %688 = vmatprep.subr.bf16.mxu0 0
      %689 = vmatpush1.bf16.xpose.msra.mxu0 0
      %690 = vmatprep.subr.bf16.mxu0 0
      %691 = vmatpush1.bf16.xpose.msra.mxu0 0
      %692 = vmatprep.subr.bf16.mxu0 0
      %693 = vmatpush1.bf16.xpose.msra.mxu0 0
      %694 = vmatprep.subr.bf16.mxu0 0
      %695 = vmatpush1.bf16.xpose.msra.mxu0 0
      %696 = vmatprep.subr.bf16.mxu0 0
      %697 = vmatpush1.bf16.xpose.msra.mxu0 0
      %698 = vmatprep.subr.bf16.mxu0 0
      %699 = vmatpush1.bf16.xpose.msra.mxu0 0
      %700 = vmatprep.subr.bf16.mxu0 0
      %701 = vmatpush1.bf16.xpose.msra.mxu0 0
      %702 = vmatprep.subr.bf16.mxu0 0
      %703 = vmatpush1.bf16.xpose.msra.mxu0 0
      %704 = vmatprep.mubr.bf16.mxu0 0
      %705 = vmatmul.mubr.bf16.gmra.mrb[0].mxu0 %v667
      %v706 = vpop.f32.mrb[0].mxu0
      %v707 = vadd.f32 0.0, %v706
      %v708 = vpop.f32.mrb[0].mxu0
      %v709 = vpop.f32.mrb[0].mxu0
      %v710 = vadd.f32 0.0, %v709
      %v711 = vpop.f32.mrb[0].mxu0
      %712 = vdwg.mxu0
      %713 = vmatprep.subr.bf16.mxu0 0
      %714 = vmatpush1.bf16.xpose.msra.mxu0 %v671
      %715 = vmatprep.subr.bf16.mxu0 0
      %716 = vmatpush1.bf16.xpose.msra.mxu0 0
      %717 = vmatprep.subr.bf16.mxu0 0
      %718 = vmatpush1.bf16.xpose.msra.mxu0 0
      %719 = vmatprep.subr.bf16.mxu0 0
      %720 = vmatpush1.bf16.xpose.msra.mxu0 0
      %721 = vmatprep.subr.bf16.mxu0 0
      %722 = vmatpush1.bf16.xpose.msra.mxu0 0
      %723 = vmatprep.subr.bf16.mxu0 0
      %724 = vmatpush1.bf16.xpose.msra.mxu0 0
      %725 = vmatprep.subr.bf16.mxu0 0
      %726 = vmatpush1.bf16.xpose.msra.mxu0 0
      %727 = vmatprep.subr.bf16.mxu0 0
      %728 = vmatpush1.bf16.xpose.msra.mxu0 0
      %729 = vmatprep.subr.bf16.mxu0 0
      %730 = vmatpush1.bf16.xpose.msra.mxu0 0
      %731 = vmatprep.subr.bf16.mxu0 0
      %732 = vmatpush1.bf16.xpose.msra.mxu0 0
      %733 = vmatprep.subr.bf16.mxu0 0
      %734 = vmatpush1.bf16.xpose.msra.mxu0 0
      %735 = vmatprep.subr.bf16.mxu0 0
      %736 = vmatpush1.bf16.xpose.msra.mxu0 0
      %737 = vmatprep.subr.bf16.mxu0 0
      %738 = vmatpush1.bf16.xpose.msra.mxu0 0
      %739 = vmatprep.subr.bf16.mxu0 0
      %740 = vmatpush1.bf16.xpose.msra.mxu0 0
      %741 = vmatprep.subr.bf16.mxu0 0
      %742 = vmatpush1.bf16.xpose.msra.mxu0 0
      %743 = vmatprep.subr.bf16.mxu0 0
      %744 = vmatpush1.bf16.xpose.msra.mxu0 0
      %745 = vmatprep.mubr.bf16.mxu0 0
      %746 = vmatmul.mubr.bf16.gmra.mrb[0].mxu0 %v668
      %v747 = vpop.f32.mrb[0].mxu0
      %v748 = vadd.f32 0.0, %v747
      %v749 = vpop.f32.mrb[0].mxu0
      %v750 = vpop.f32.mrb[0].mxu0
      %v751 = vadd.f32 0.0, %v750
      %v752 = vpop.f32.mrb[0].mxu0
      %753 = vdwg.mxu0
      %754 = vmatprep.subr.bf16.mxu0 0
      %755 = vmatpush1.bf16.xpose.msra.mxu0 %v671
      %756 = vmatprep.subr.bf16.mxu0 0
      %757 = vmatpush1.bf16.xpose.msra.mxu0 0
      %758 = vmatprep.subr.bf16.mxu0 0
      %759 = vmatpush1.bf16.xpose.msra.mxu0 0
      %760 = vmatprep.subr.bf16.mxu0 0
      %761 = vmatpush1.bf16.xpose.msra.mxu0 0
      %762 = vmatprep.subr.bf16.mxu0 0
      %763 = vmatpush1.bf16.xpose.msra.mxu0 0
      %764 = vmatprep.subr.bf16.mxu0 0
      %765 = vmatpush1.bf16.xpose.msra.mxu0 0
      %766 = vmatprep.subr.bf16.mxu0 0
      %767 = vmatpush1.bf16.xpose.msra.mxu0 0
      %768 = vmatprep.subr.bf16.mxu0 0
      %769 = vmatpush1.bf16.xpose.msra.mxu0 0
      %770 = vmatprep.subr.bf16.mxu0 0
      %771 = vmatpush1.bf16.xpose.msra.mxu0 0
      %772 = vmatprep.subr.bf16.mxu0 0
      %773 = vmatpush1.bf16.xpose.msra.mxu0 0
      %774 = vmatprep.subr.bf16.mxu0 0
      %775 = vmatpush1.bf16.xpose.msra.mxu0 0
      %776 = vmatprep.subr.bf16.mxu0 0
      %777 = vmatpush1.bf16.xpose.msra.mxu0 0
      %778 = vmatprep.subr.bf16.mxu0 0
      %779 = vmatpush1.bf16.xpose.msra.mxu0 0
      %780 = vmatprep.subr.bf16.mxu0 0
      %781 = vmatpush1.bf16.xpose.msra.mxu0 0
      %782 = vmatprep.subr.bf16.mxu0 0
      %783 = vmatpush1.bf16.xpose.msra.mxu0 0
      %784 = vmatprep.subr.bf16.mxu0 0
      %785 = vmatpush1.bf16.xpose.msra.mxu0 0
      %786 = vmatprep.mubr.bf16.mxu0 0
      %787 = vmatmul.mubr.bf16.gmra.mrb[0].mxu0 %v669
      %v788 = vpop.f32.mrb[0].mxu0
      %v789 = vadd.f32 0.0, %v788
      %v790 = vpop.f32.mrb[0].mxu0
      %v791 = vpop.f32.mrb[0].mxu0
      %v792 = vadd.f32 0.0, %v791
      %v793 = vpop.f32.mrb[0].mxu0
      %794 = vdwg.mxu0
      %795 = vmatprep.subr.bf16.mxu0 0
      %796 = vmatpush1.bf16.xpose.msra.mxu0 %v671
      %797 = vmatprep.subr.bf16.mxu0 0
      %798 = vmatpush1.bf16.xpose.msra.mxu0 0
      %799 = vmatprep.subr.bf16.mxu0 0
      %800 = vmatpush1.bf16.xpose.msra.mxu0 0
      %801 = vmatprep.subr.bf16.mxu0 0
      %802 = vmatpush1.bf16.xpose.msra.mxu0 0
      %803 = vmatprep.subr.bf16.mxu0 0
      %804 = vmatpush1.bf16.xpose.msra.mxu0 0
      %805 = vmatprep.subr.bf16.mxu0 0
      %806 = vmatpush1.bf16.xpose.msra.mxu0 0
      %807 = vmatprep.subr.bf16.mxu0 0
      %808 = vmatpush1.bf16.xpose.msra.mxu0 0
      %809 = vmatprep.subr.bf16.mxu0 0
      %810 = vmatpush1.bf16.xpose.msra.mxu0 0
      %811 = vmatprep.subr.bf16.mxu0 0
      %812 = vmatpush1.bf16.xpose.msra.mxu0 0
      %813 = vmatprep.subr.bf16.mxu0 0
      %814 = vmatpush1.bf16.xpose.msra.mxu0 0
      %815 = vmatprep.subr.bf16.mxu0 0
      %816 = vmatpush1.bf16.xpose.msra.mxu0 0
      %817 = vmatprep.subr.bf16.mxu0 0
      %818 = vmatpush1.bf16.xpose.msra.mxu0 0
      %819 = vmatprep.subr.bf16.mxu0 0
      %820 = vmatpush1.bf16.xpose.msra.mxu0 0
      %821 = vmatprep.subr.bf16.mxu0 0
      %822 = vmatpush1.bf16.xpose.msra.mxu0 0
      %823 = vmatprep.subr.bf16.mxu0 0
      %824 = vmatpush1.bf16.xpose.msra.mxu0 0
      %825 = vmatprep.subr.bf16.mxu0 0
      %826 = vmatpush1.bf16.xpose.msra.mxu0 0
      %827 = vmatprep.mubr.bf16.mxu0 0
      %828 = vmatmul.mubr.bf16.gmra.mrb[0].mxu0 %v670
      %v829 = vpop.f32.mrb[0].mxu0
      %v830 = vadd.f32 0.0, %v829
      %v831 = vpop.f32.mrb[0].mxu0
      %v832 = vpop.f32.mrb[0].mxu0
      %v833 = vadd.f32 0.0, %v832
      %v834 = vpop.f32.mrb[0].mxu0
      %835 = vdwg.mxu0
      %v836 = vmul.f32 %v707, 0.35355338
      %v837 = vmul.f32 %v710, 0.35355338
      %v838 = vmul.f32 %v748, 0.35355338
      %v839 = vmul.f32 %v751, 0.35355338
      %v840 = vmul.f32 %v789, 0.35355338
      %v841 = vmul.f32 %v792, 0.35355338
      %v842 = vmul.f32 %v830, 0.35355338
      %v843 = vmul.f32 %v833, 0.35355338
      %v844 = vadd.f32 %v836, %v337
      %v845 = vadd.f32 %v837, %v338
      %v846 = vadd.f32 %v838, %v337
      %v847 = vadd.f32 %v839, %v338
      %v848 = vadd.f32 %v840, %v337
      %v849 = vadd.f32 %v841, %v338
      %v850 = vadd.f32 %v842, %v337
      %v851 = vadd.f32 %v843, %v338
      %vm852 = vcmask 130048
      %v853 = vsel %vm852, %v844, -inf
      %854 = vmax.xlane.f32.xlu0 %v853
      %v855 = vpop.xlane.xlu0 %854
      %v856 = vsel %vm852, %v845, -inf
      %857 = vmax.xlane.f32.xlu0 %v856
      %v858 = vpop.xlane.xlu0 %857
      %v859 = vsel %vm852, %v846, -inf
      %860 = vmax.xlane.f32.xlu0 %v859
      %v861 = vpop.xlane.xlu0 %860
      %v862 = vsel %vm852, %v847, -inf
      %863 = vmax.xlane.f32.xlu0 %v862
      %v864 = vpop.xlane.xlu0 %863
      %v865 = vsel %vm852, %v848, -inf
      %866 = vmax.xlane.f32.xlu0 %v865
      %v867 = vpop.xlane.xlu0 %866
      %v868 = vsel %vm852, %v849, -inf
      %869 = vmax.xlane.f32.xlu0 %v868
      %v870 = vpop.xlane.xlu0 %869
      %v871 = vsel %vm852, %v850, -inf
      %872 = vmax.xlane.f32.xlu0 %v871
      %v873 = vpop.xlane.xlu0 %872
      %v874 = vsel %vm852, %v851, -inf
      %875 = vmax.xlane.f32.xlu0 %v874
      %v876 = vpop.xlane.xlu0 %875
      %v877 = vsub.f32 %v844, %v855
      %v878 = vsub.f32 %v845, %v858
      %v879 = vsub.f32 %v846, %v861
      %v880 = vsub.f32 %v847, %v864
      %v881 = vsub.f32 %v848, %v867
      %v882 = vsub.f32 %v849, %v870
      %v883 = vsub.f32 %v850, %v873
      %v884 = vsub.f32 %v851, %v876
      %v885 = vmul.f32 %v877, 1.442695
      %v886 = vpow.pop %v885
      %v887 = vmul.f32 %v878, 1.442695
      %v888 = vpow.pop %v887
      %v889 = vmul.f32 %v879, 1.442695
      %v890 = vpow.pop %v889
      %v891 = vmul.f32 %v880, 1.442695
      %v892 = vpow.pop %v891
      %v893 = vmul.f32 %v881, 1.442695
      %v894 = vpow.pop %v893
      %v895 = vmul.f32 %v882, 1.442695
      %v896 = vpow.pop %v895
      %v897 = vmul.f32 %v883, 1.442695
      %v898 = vpow.pop %v897
      %v899 = vmul.f32 %v884, 1.442695
      %v900 = vpow.pop %v899
      %v901 = vsel %vm852, %v886, 0.0
      %902 = vadd.xlane.f32.xlu0 %v901
      %v903 = vpop.xlane.xlu0 %902
      %v904 = vsel %vm852, %v888, 0.0
      %905 = vadd.xlane.f32.xlu0 %v904
      %v906 = vpop.xlane.xlu0 %905
      %v907 = vsel %vm852, %v890, 0.0
      %908 = vadd.xlane.f32.xlu0 %v907
      %v909 = vpop.xlane.xlu0 %908
      %v910 = vsel %vm852, %v892, 0.0
      %911 = vadd.xlane.f32.xlu0 %v910
      %v912 = vpop.xlane.xlu0 %911
      %v913 = vsel %vm852, %v894, 0.0
      %914 = vadd.xlane.f32.xlu0 %v913
      %v915 = vpop.xlane.xlu0 %914
      %v916 = vsel %vm852, %v896, 0.0
      %917 = vadd.xlane.f32.xlu0 %v916
      %v918 = vpop.xlane.xlu0 %917
      %v919 = vsel %vm852, %v898, 0.0
      %920 = vadd.xlane.f32.xlu0 %v919
      %v921 = vpop.xlane.xlu0 %920
      %v922 = vsel %vm852, %v900, 0.0
      %923 = vadd.xlane.f32.xlu0 %v922
      %v924 = vpop.xlane.xlu0 %923
      %v925 = vrcp.pop %v903
      %v926 = vmul.f32 %v886, %v925
      %v927 = vrcp.pop %v906
      %v928 = vmul.f32 %v888, %v927
      %v929 = vrcp.pop %v909
      %v930 = vmul.f32 %v890, %v929
      %v931 = vrcp.pop %v912
      %v932 = vmul.f32 %v892, %v931
      %v933 = vrcp.pop %v915
      %v934 = vmul.f32 %v894, %v933
      %v935 = vrcp.pop %v918
      %v936 = vmul.f32 %v896, %v935
      %v937 = vrcp.pop %v921
      %v938 = vmul.f32 %v898, %v937
      %v939 = vrcp.pop %v924
      %v940 = vmul.f32 %v900, %v939
      %v941 = vmul.f32 %v613, %v642
      %v942 = vmul.f32 %v616, %v642
      %v943 = vmul.f32 %v613, %v646
      %v944 = vmul.f32 %v616, %v646
      %v945 = vmul.f32 %v613, %v650
      %v946 = vmul.f32 %v616, %v650
      %v947 = vmul.f32 %v613, %v654
      %v948 = vmul.f32 %v616, %v654
      %v949 = vpack.c.bf16 %v942, %v941
      %v950 = vpack.c.bf16 %v944, %v943
      %v951 = vpack.c.bf16 %v946, %v945
      %v952 = vpack.c.bf16 %v948, %v947
      %v953 = vpack.c.bf16 %v928, %v926
      %v954 = vpack.c.bf16 %v932, %v930
      %v955 = vpack.c.bf16 %v936, %v934
      %v956 = vpack.c.bf16 %v940, %v938
      %v958 = vsel %vm852, %v953, 0
      %960 = vmatprep.subr.bf16.mxu0 0
      %961 = vmatpush1.bf16.msra.mxu0 %v949
      %962 = vmatprep.subr.bf16.mxu0 0
      %963 = vmatpush1.bf16.msra.mxu0 0
      %964 = vmatprep.subr.bf16.mxu0 0
      %965 = vmatpush1.bf16.msra.mxu0 0
      %966 = vmatprep.subr.bf16.mxu0 0
      %967 = vmatpush1.bf16.msra.mxu0 0
      %968 = vmatprep.subr.bf16.mxu0 0
      %969 = vmatpush1.bf16.msra.mxu0 0
      %970 = vmatprep.subr.bf16.mxu0 0
      %971 = vmatpush1.bf16.msra.mxu0 0
      %972 = vmatprep.subr.bf16.mxu0 0
      %973 = vmatpush1.bf16.msra.mxu0 0
      %974 = vmatprep.subr.bf16.mxu0 0
      %975 = vmatpush1.bf16.msra.mxu0 0
      %976 = vmatprep.subr.bf16.mxu0 0
      %977 = vmatpush1.bf16.msra.mxu0 0
      %978 = vmatprep.subr.bf16.mxu0 0
      %979 = vmatpush1.bf16.msra.mxu0 0
      %980 = vmatprep.subr.bf16.mxu0 0
      %981 = vmatpush1.bf16.msra.mxu0 0
      %982 = vmatprep.subr.bf16.mxu0 0
      %983 = vmatpush1.bf16.msra.mxu0 0
      %984 = vmatprep.subr.bf16.mxu0 0
      %985 = vmatpush1.bf16.msra.mxu0 0
      %986 = vmatprep.subr.bf16.mxu0 0
      %987 = vmatpush1.bf16.msra.mxu0 0
      %988 = vmatprep.subr.bf16.mxu0 0
      %989 = vmatpush1.bf16.msra.mxu0 0
      %990 = vmatprep.subr.bf16.mxu0 0
      %991 = vmatpush1.bf16.msra.mxu0 0
      %992 = vmatprep.mubr.bf16.mxu0 0
      %993 = vmatmul.mubr.bf16.gmra.mrb[0].mxu0 %v958
      %v994 = vpop.f32.mrb[0].mxu0
      %v995 = vadd.f32 0.0, %v994
      %v996 = vpop.f32.mrb[0].mxu0
      %v997 = vpop.f32.mrb[0].mxu0
      %v998 = vadd.f32 0.0, %v997
      %v999 = vpop.f32.mrb[0].mxu0
      %1000 = vdwg.mxu0
      %v1002 = vsel %vm852, %v954, 0
      %1004 = vmatprep.subr.bf16.mxu0 0
      %1005 = vmatpush1.bf16.msra.mxu0 %v950
      %1006 = vmatprep.subr.bf16.mxu0 0
      %1007 = vmatpush1.bf16.msra.mxu0 0
      %1008 = vmatprep.subr.bf16.mxu0 0
      %1009 = vmatpush1.bf16.msra.mxu0 0
      %1010 = vmatprep.subr.bf16.mxu0 0
      %1011 = vmatpush1.bf16.msra.mxu0 0
      %1012 = vmatprep.subr.bf16.mxu0 0
      %1013 = vmatpush1.bf16.msra.mxu0 0
      %1014 = vmatprep.subr.bf16.mxu0 0
      %1015 = vmatpush1.bf16.msra.mxu0 0
      %1016 = vmatprep.subr.bf16.mxu0 0
      %1017 = vmatpush1.bf16.msra.mxu0 0
      %1018 = vmatprep.subr.bf16.mxu0 0
      %1019 = vmatpush1.bf16.msra.mxu0 0
      %1020 = vmatprep.subr.bf16.mxu0 0
      %1021 = vmatpush1.bf16.msra.mxu0 0
      %1022 = vmatprep.subr.bf16.mxu0 0
      %1023 = vmatpush1.bf16.msra.mxu0 0
      %1024 = vmatprep.subr.bf16.mxu0 0
      %1025 = vmatpush1.bf16.msra.mxu0 0
      %1026 = vmatprep.subr.bf16.mxu0 0
      %1027 = vmatpush1.bf16.msra.mxu0 0
      %1028 = vmatprep.subr.bf16.mxu0 0
      %1029 = vmatpush1.bf16.msra.mxu0 0
      %1030 = vmatprep.subr.bf16.mxu0 0
      %1031 = vmatpush1.bf16.msra.mxu0 0
      %1032 = vmatprep.subr.bf16.mxu0 0
      %1033 = vmatpush1.bf16.msra.mxu0 0
      %1034 = vmatprep.subr.bf16.mxu0 0
      %1035 = vmatpush1.bf16.msra.mxu0 0
      %1036 = vmatprep.mubr.bf16.mxu0 0
      %1037 = vmatmul.mubr.bf16.gmra.mrb[0].mxu0 %v1002
      %v1038 = vpop.f32.mrb[0].mxu0
      %v1039 = vadd.f32 0.0, %v1038
      %v1040 = vpop.f32.mrb[0].mxu0
      %v1041 = vpop.f32.mrb[0].mxu0
      %v1042 = vadd.f32 0.0, %v1041
      %v1043 = vpop.f32.mrb[0].mxu0
      %1044 = vdwg.mxu0
      %v1046 = vsel %vm852, %v955, 0
      %1048 = vmatprep.subr.bf16.mxu0 0
      %1049 = vmatpush1.bf16.msra.mxu0 %v951
      %1050 = vmatprep.subr.bf16.mxu0 0
      %1051 = vmatpush1.bf16.msra.mxu0 0
      %1052 = vmatprep.subr.bf16.mxu0 0
      %1053 = vmatpush1.bf16.msra.mxu0 0
      %1054 = vmatprep.subr.bf16.mxu0 0
      %1055 = vmatpush1.bf16.msra.mxu0 0
      %1056 = vmatprep.subr.bf16.mxu0 0
      %1057 = vmatpush1.bf16.msra.mxu0 0
      %1058 = vmatprep.subr.bf16.mxu0 0
      %1059 = vmatpush1.bf16.msra.mxu0 0
      %1060 = vmatprep.subr.bf16.mxu0 0
      %1061 = vmatpush1.bf16.msra.mxu0 0
      %1062 = vmatprep.subr.bf16.mxu0 0
      %1063 = vmatpush1.bf16.msra.mxu0 0
      %1064 = vmatprep.subr.bf16.mxu0 0
      %1065 = vmatpush1.bf16.msra.mxu0 0
      %1066 = vmatprep.subr.bf16.mxu0 0
      %1067 = vmatpush1.bf16.msra.mxu0 0
      %1068 = vmatprep.subr.bf16.mxu0 0
      %1069 = vmatpush1.bf16.msra.mxu0 0
      %1070 = vmatprep.subr.bf16.mxu0 0
      %1071 = vmatpush1.bf16.msra.mxu0 0
      %1072 = vmatprep.subr.bf16.mxu0 0
      %1073 = vmatpush1.bf16.msra.mxu0 0
      %1074 = vmatprep.subr.bf16.mxu0 0
      %1075 = vmatpush1.bf16.msra.mxu0 0
      %1076 = vmatprep.subr.bf16.mxu0 0
      %1077 = vmatpush1.bf16.msra.mxu0 0
      %1078 = vmatprep.subr.bf16.mxu0 0
      %1079 = vmatpush1.bf16.msra.mxu0 0
      %1080 = vmatprep.mubr.bf16.mxu0 0
      %1081 = vmatmul.mubr.bf16.gmra.mrb[0].mxu0 %v1046
      %v1082 = vpop.f32.mrb[0].mxu0
      %v1083 = vadd.f32 0.0, %v1082
      %v1084 = vpop.f32.mrb[0].mxu0
      %v1085 = vpop.f32.mrb[0].mxu0
      %v1086 = vadd.f32 0.0, %v1085
      %v1087 = vpop.f32.mrb[0].mxu0
      %1088 = vdwg.mxu0
      %v1090 = vsel %vm852, %v956, 0
      %1092 = vmatprep.subr.bf16.mxu0 0
      %1093 = vmatpush1.bf16.msra.mxu0 %v952
      %1094 = vmatprep.subr.bf16.mxu0 0
      %1095 = vmatpush1.bf16.msra.mxu0 0
      %1096 = vmatprep.subr.bf16.mxu0 0
      %1097 = vmatpush1.bf16.msra.mxu0 0
      %1098 = vmatprep.subr.bf16.mxu0 0
      %1099 = vmatpush1.bf16.msra.mxu0 0
      %1100 = vmatprep.subr.bf16.mxu0 0
      %1101 = vmatpush1.bf16.msra.mxu0 0
      %1102 = vmatprep.subr.bf16.mxu0 0
      %1103 = vmatpush1.bf16.msra.mxu0 0
      %1104 = vmatprep.subr.bf16.mxu0 0
      %1105 = vmatpush1.bf16.msra.mxu0 0
      %1106 = vmatprep.subr.bf16.mxu0 0
      %1107 = vmatpush1.bf16.msra.mxu0 0
      %1108 = vmatprep.subr.bf16.mxu0 0
      %1109 = vmatpush1.bf16.msra.mxu0 0
      %1110 = vmatprep.subr.bf16.mxu0 0
      %1111 = vmatpush1.bf16.msra.mxu0 0
      %1112 = vmatprep.subr.bf16.mxu0 0
      %1113 = vmatpush1.bf16.msra.mxu0 0
      %1114 = vmatprep.subr.bf16.mxu0 0
      %1115 = vmatpush1.bf16.msra.mxu0 0
      %1116 = vmatprep.subr.bf16.mxu0 0
      %1117 = vmatpush1.bf16.msra.mxu0 0
      %1118 = vmatprep.subr.bf16.mxu0 0
      %1119 = vmatpush1.bf16.msra.mxu0 0
      %1120 = vmatprep.subr.bf16.mxu0 0
      %1121 = vmatpush1.bf16.msra.mxu0 0
      %1122 = vmatprep.subr.bf16.mxu0 0
      %1123 = vmatpush1.bf16.msra.mxu0 0
      %1124 = vmatprep.mubr.bf16.mxu0 0
      %1125 = vmatmul.mubr.bf16.gmra.mrb[0].mxu0 %v1090
      %v1126 = vpop.f32.mrb[0].mxu0
      %v1127 = vadd.f32 0.0, %v1126
      %v1128 = vpop.f32.mrb[0].mxu0
      %v1129 = vpop.f32.mrb[0].mxu0
      %v1130 = vadd.f32 0.0, %v1129
      %v1131 = vpop.f32.mrb[0].mxu0
      %1132 = vdwg.mxu0
      %v1133 = vadd.f32 %v995, %v1039
      %v1134 = vadd.f32 %v1133, %v1083
      %v1135 = vadd.f32 %v1134, %v1127
      %v1136 = vadd.f32 %v998, %v1042
      %v1137 = vadd.f32 %v1136, %v1086
      %v1138 = vadd.f32 %v1137, %v1130
      %v1139 = vpack.c.bf16 %v1138, %v1135
      %s1140 = smul.u32 %s340, 16
      %s1141 = smul.addr %s1140, 4
      %s1142 = scalar_lea.vmem [#allocation6], %s1141
      %v1143 = vld [vmem:[%s1142] sm:$0xf]
      %v1144 = vld [vmem:[%s1142 + $0x4] sm:$0xf]
      %v1145 = vld [vmem:[%s1142 + $0x8] sm:$0xf]
      %v1146 = vld [vmem:[%s1142 + $0xc] sm:$0xf]
      %v1147 = vld [vmem:[%s1142 + $0x10] sm:$0xf]
      %v1148 = vld [vmem:[%s1142 + $0x14] sm:$0xf]
      %v1149 = vld [vmem:[%s1142 + $0x18] sm:$0xf]
      %v1150 = vld [vmem:[%s1142 + $0x1c] sm:$0xf]
      %v1151 = vld [vmem:[%s1142 + $0x20] sm:$0xf]
      %v1152 = vld [vmem:[%s1142 + $0x24] sm:$0xf]
      %v1153 = vld [vmem:[%s1142 + $0x28] sm:$0xf]
      %v1154 = vld [vmem:[%s1142 + $0x2c] sm:$0xf]
      %v1155 = vld [vmem:[%s1142 + $0x30] sm:$0xf]
      %v1156 = vld [vmem:[%s1142 + $0x34] sm:$0xf]
      %v1157 = vld [vmem:[%s1142 + $0x38] sm:$0xf]
      %v1158 = vld [vmem:[%s1142 + $0x3c] sm:$0xf]
      %v1175 = vunpack.c.l.b16 %v1143
      %v1176 = vunpack.c.l.b16 %v1144
      %v1177 = vunpack.c.l.b16 %v1145
      %v1178 = vunpack.c.l.b16 %v1146
      %v1179 = vunpack.c.l.b16 %v1147
      %v1180 = vunpack.c.l.b16 %v1148
      %v1181 = vunpack.c.l.b16 %v1149
      %v1182 = vunpack.c.l.b16 %v1150
      %v1183 = vunpack.c.l.b16 %v1151
      %v1184 = vunpack.c.l.b16 %v1152
      %v1185 = vunpack.c.l.b16 %v1153
      %v1186 = vunpack.c.l.b16 %v1154
      %v1187 = vunpack.c.l.b16 %v1155
      %v1188 = vunpack.c.l.b16 %v1156
      %v1189 = vunpack.c.l.b16 %v1157
      %v1190 = vunpack.c.l.b16 %v1158
      %v1191 = vpack.c.b16 %v1176, %v1175
      %v1192 = vpack.c.b16 %v1178, %v1177
      %v1193 = vpack.c.b16 %v1180, %v1179
      %v1194 = vpack.c.b16 %v1182, %v1181
      %v1195 = vpack.c.b16 %v1184, %v1183
      %v1196 = vpack.c.b16 %v1186, %v1185
      %v1197 = vpack.c.b16 %v1188, %v1187
      %v1198 = vpack.c.b16 %v1190, %v1189
      %1207 = vmatprep.subr.bf16.mxu0 0
      %1208 = vmatpush1.bf16.msra.mxu0 %v1191
      %1209 = vmatprep.subr.bf16.mxu0 0
      %1210 = vmatpush1.bf16.msra.mxu0 %v1192
      %1211 = vmatprep.subr.bf16.mxu0 0
      %1212 = vmatpush1.bf16.msra.mxu0 %v1193
      %1213 = vmatprep.subr.bf16.mxu0 0
      %1214 = vmatpush1.bf16.msra.mxu0 %v1194
      %1215 = vmatprep.subr.bf16.mxu0 0
      %1216 = vmatpush1.bf16.msra.mxu0 %v1195
      %1217 = vmatprep.subr.bf16.mxu0 0
      %1218 = vmatpush1.bf16.msra.mxu0 %v1196
      %1219 = vmatprep.subr.bf16.mxu0 0
      %1220 = vmatpush1.bf16.msra.mxu0 %v1197
      %1221 = vmatprep.subr.bf16.mxu0 0
      %1222 = vmatpush1.bf16.msra.mxu0 %v1198
      %1223 = vmatprep.subr.bf16.mxu0 0
      %1224 = vmatpush1.bf16.msra.mxu0 0
      %1225 = vmatprep.subr.bf16.mxu0 0
      %1226 = vmatpush1.bf16.msra.mxu0 0
      %1227 = vmatprep.subr.bf16.mxu0 0
      %1228 = vmatpush1.bf16.msra.mxu0 0
      %1229 = vmatprep.subr.bf16.mxu0 0
      %1230 = vmatpush1.bf16.msra.mxu0 0
      %1231 = vmatprep.subr.bf16.mxu0 0
      %1232 = vmatpush1.bf16.msra.mxu0 0
      %1233 = vmatprep.subr.bf16.mxu0 0
      %1234 = vmatpush1.bf16.msra.mxu0 0
      %1235 = vmatprep.subr.bf16.mxu0 0
      %1236 = vmatpush1.bf16.msra.mxu0 0
      %1237 = vmatprep.subr.bf16.mxu0 0
      %1238 = vmatpush1.bf16.msra.mxu0 0
      %1239 = vmatprep.mubr.bf16.mxu0 0
      %1240 = vmatmul.mubr.bf16.gmra.mrb[0].mxu0 %v1139
      %v1241 = vpop.f32.mrb[0].mxu0
      %v1242 = vadd.f32 0.0, %v1241
      %v1243 = vpop.f32.mrb[0].mxu0
      %v1244 = vpop.f32.mrb[0].mxu0
      %v1245 = vadd.f32 0.0, %v1244
      %v1246 = vpop.f32.mrb[0].mxu0
      %1247 = vdwg.mxu0
      %v1248 = vadd.f32 %v345, %v1242
      %v1249 = vadd.f32 %v346, %v1245
      %s1250 = scalar_lea.vmem [#allocation12], %s340
      %v1251 = vld [vmem:[%s1250] sm:$0x1]
      %v1252 = vmul.f32 %v1248, %v1248
      %v1253 = vmul.f32 %v1249, %v1249
      %1254 = vadd.xlane.f32.xlu0 %v1252
      %v1255 = vpop.xlane.xlu0 %1254
      %1256 = vadd.xlane.f32.xlu0 %v1253
      %v1257 = vpop.xlane.xlu0 %1256
      %v1258 = vmul.f32 %v1255, 0.03125
      %v1259 = vmul.f32 %v1257, 0.03125
      %v1260 = vadd.f32 %v1258, 1e-06
      %v1261 = vadd.f32 %v1259, 1e-06
      %v1262 = vrsqrt.pop %v1260
      %v1263 = vrsqrt.pop %v1261
      %v1264 = vmul.f32 %v1248, %v1262
      %v1265 = vmul.f32 %v1249, %v1263
      %v1267 = vlaneseq
      %v1268 = vshrl.u32 %v1267, 7
      %v1269 = vsub.s32 0, %v1268
      %v1270 = vrot.slane %v1251, %v1269
      %v1272 = vmul.f32 %v1264, %v1270
      %v1273 = vmul.f32 %v1265, %v1270
      %v1274 = vpack.c.bf16 %v1273, %v1272
      %s1275 = smul.u32 %s340, 32
      %s1276 = smul.addr %s1275, 4
      %s1277 = scalar_lea.vmem [#allocation7], %s1276
      %v1278 = vld [vmem:[%s1277] sm:$0xff]
      %v1279 = vld [vmem:[%s1277 + $0x8] sm:$0xff]
      %v1280 = vld [vmem:[%s1277 + $0x10] sm:$0xff]
      %v1281 = vld [vmem:[%s1277 + $0x18] sm:$0xff]
      %v1282 = vld [vmem:[%s1277 + $0x20] sm:$0xff]
      %v1283 = vld [vmem:[%s1277 + $0x28] sm:$0xff]
      %v1284 = vld [vmem:[%s1277 + $0x30] sm:$0xff]
      %v1285 = vld [vmem:[%s1277 + $0x38] sm:$0xff]
      %v1286 = vld [vmem:[%s1277 + $0x40] sm:$0xff]
      %v1287 = vld [vmem:[%s1277 + $0x48] sm:$0xff]
      %v1288 = vld [vmem:[%s1277 + $0x50] sm:$0xff]
      %v1289 = vld [vmem:[%s1277 + $0x58] sm:$0xff]
      %v1290 = vld [vmem:[%s1277 + $0x60] sm:$0xff]
      %v1291 = vld [vmem:[%s1277 + $0x68] sm:$0xff]
      %v1292 = vld [vmem:[%s1277 + $0x70] sm:$0xff]
      %v1293 = vld [vmem:[%s1277 + $0x78] sm:$0xff]
      %v1310 = vunpack.c.l.b16 %v1278
      %v1311 = vunpack.c.h.b16 %v1278
      %v1312 = vunpack.c.l.b16 %v1279
      %v1313 = vunpack.c.h.b16 %v1279
      %v1314 = vunpack.c.l.b16 %v1280
      %v1315 = vunpack.c.h.b16 %v1280
      %v1316 = vunpack.c.l.b16 %v1281
      %v1317 = vunpack.c.h.b16 %v1281
      %v1318 = vunpack.c.l.b16 %v1282
      %v1319 = vunpack.c.h.b16 %v1282
      %v1320 = vunpack.c.l.b16 %v1283
      %v1321 = vunpack.c.h.b16 %v1283
      %v1322 = vunpack.c.l.b16 %v1284
      %v1323 = vunpack.c.h.b16 %v1284
      %v1324 = vunpack.c.l.b16 %v1285
      %v1325 = vunpack.c.h.b16 %v1285
      %v1326 = vunpack.c.l.b16 %v1286
      %v1327 = vunpack.c.h.b16 %v1286
      %v1328 = vunpack.c.l.b16 %v1287
      %v1329 = vunpack.c.h.b16 %v1287
      %v1330 = vunpack.c.l.b16 %v1288
      %v1331 = vunpack.c.h.b16 %v1288
      %v1332 = vunpack.c.l.b16 %v1289
      %v1333 = vunpack.c.h.b16 %v1289
      %v1334 = vunpack.c.l.b16 %v1290
      %v1335 = vunpack.c.h.b16 %v1290
      %v1336 = vunpack.c.l.b16 %v1291
      %v1337 = vunpack.c.h.b16 %v1291
      %v1338 = vunpack.c.l.b16 %v1292
      %v1339 = vunpack.c.h.b16 %v1292
      %v1340 = vunpack.c.l.b16 %v1293
      %v1341 = vunpack.c.h.b16 %v1293
      %v1342 = vpack.c.b16 %v1312, %v1310
      %v1343 = vpack.c.b16 %v1313, %v1311
      %v1344 = vpack.c.b16 %v1316, %v1314
      %v1345 = vpack.c.b16 %v1317, %v1315
      %v1346 = vpack.c.b16 %v1320, %v1318
      %v1347 = vpack.c.b16 %v1321, %v1319
      %v1348 = vpack.c.b16 %v1324, %v1322
      %v1349 = vpack.c.b16 %v1325, %v1323
      %v1350 = vpack.c.b16 %v1328, %v1326
      %v1351 = vpack.c.b16 %v1329, %v1327
      %v1352 = vpack.c.b16 %v1332, %v1330
      %v1353 = vpack.c.b16 %v1333, %v1331
      %v1354 = vpack.c.b16 %v1336, %v1334
      %v1355 = vpack.c.b16 %v1337, %v1335
      %v1356 = vpack.c.b16 %v1340, %v1338
      %v1357 = vpack.c.b16 %v1341, %v1339
      %1374 = vmatprep.subr.bf16.mxu0 %v1343
      %1375 = vmatpush1.bf16.msra.mxu0 %v1342
      %1376 = vmatprep.subr.bf16.mxu0 %v1345
      %1377 = vmatpush1.bf16.msra.mxu0 %v1344
      %1378 = vmatprep.subr.bf16.mxu0 %v1347
      %1379 = vmatpush1.bf16.msra.mxu0 %v1346
      %1380 = vmatprep.subr.bf16.mxu0 %v1349
      %1381 = vmatpush1.bf16.msra.mxu0 %v1348
      %1382 = vmatprep.subr.bf16.mxu0 %v1351
      %1383 = vmatpush1.bf16.msra.mxu0 %v1350
      %1384 = vmatprep.subr.bf16.mxu0 %v1353
      %1385 = vmatpush1.bf16.msra.mxu0 %v1352
      %1386 = vmatprep.subr.bf16.mxu0 %v1355
      %1387 = vmatpush1.bf16.msra.mxu0 %v1354
      %1388 = vmatprep.subr.bf16.mxu0 %v1357
      %1389 = vmatpush1.bf16.msra.mxu0 %v1356
      %1390 = vmatprep.subr.bf16.mxu0 0
      %1391 = vmatpush1.bf16.msra.mxu0 0
      %1392 = vmatprep.subr.bf16.mxu0 0
      %1393 = vmatpush1.bf16.msra.mxu0 0
      %1394 = vmatprep.subr.bf16.mxu0 0
      %1395 = vmatpush1.bf16.msra.mxu0 0
      %1396 = vmatprep.subr.bf16.mxu0 0
      %1397 = vmatpush1.bf16.msra.mxu0 0
      %1398 = vmatprep.subr.bf16.mxu0 0
      %1399 = vmatpush1.bf16.msra.mxu0 0
      %1400 = vmatprep.subr.bf16.mxu0 0
      %1401 = vmatpush1.bf16.msra.mxu0 0
      %1402 = vmatprep.subr.bf16.mxu0 0
      %1403 = vmatpush1.bf16.msra.mxu0 0
      %1404 = vmatprep.subr.bf16.mxu0 0
      %1405 = vmatpush1.bf16.msra.mxu0 0
      %1406 = vmatprep.mubr.bf16.mxu0 0
      %1407 = vmatmul.mubr.bf16.gmra.mrb[0].mxu0 %v1274
      %v1408 = vpop.f32.mrb[0].mxu0
      %v1409 = vadd.f32 0.0, %v1408
      %v1410 = vpop.f32.mrb[0].mxu0
      %v1411 = vadd.f32 0.0, %v1410
      %v1412 = vpop.f32.mrb[0].mxu0
      %v1413 = vadd.f32 0.0, %v1412
      %v1414 = vpop.f32.mrb[0].mxu0
      %v1415 = vadd.f32 0.0, %v1414
      %1416 = vdwg.mxu0
      %v1417 = vmul.f32 %v1409, 0.5
      %v1418 = vmul.f32 %v1413, 0.5
      %v1419 = vtanh.pop %v1417
      %v1420 = vtanh.pop %v1418
      %v1421 = vadd.f32 %v1419, 1.0
      %v1422 = vadd.f32 %v1420, 1.0
      %v1423 = vmul.f32 %v1421, 0.5
      %v1424 = vmul.f32 %v1422, 0.5
      %v1425 = vmul.f32 %v1409, %v1423
      %v1426 = vmul.f32 %v1413, %v1424
      %v1427 = vmul.f32 %v1425, %v1411
      %v1428 = vmul.f32 %v1426, %v1415
      %v1429 = vpack.c.bf16 %v1428, %v1427
      %s1430 = smul.addr %s1140, 4
      %s1431 = scalar_lea.vmem [#allocation9], %s1430
      %v1432 = vld [vmem:[%s1431] sm:$0xf]
      %v1433 = vld [vmem:[%s1431 + $0x4] sm:$0xf]
      %v1434 = vld [vmem:[%s1431 + $0x8] sm:$0xf]
      %v1435 = vld [vmem:[%s1431 + $0xc] sm:$0xf]
      %v1436 = vld [vmem:[%s1431 + $0x10] sm:$0xf]
      %v1437 = vld [vmem:[%s1431 + $0x14] sm:$0xf]
      %v1438 = vld [vmem:[%s1431 + $0x18] sm:$0xf]
      %v1439 = vld [vmem:[%s1431 + $0x1c] sm:$0xf]
      %v1440 = vld [vmem:[%s1431 + $0x20] sm:$0xf]
      %v1441 = vld [vmem:[%s1431 + $0x24] sm:$0xf]
      %v1442 = vld [vmem:[%s1431 + $0x28] sm:$0xf]
      %v1443 = vld [vmem:[%s1431 + $0x2c] sm:$0xf]
      %v1444 = vld [vmem:[%s1431 + $0x30] sm:$0xf]
      %v1445 = vld [vmem:[%s1431 + $0x34] sm:$0xf]
      %v1446 = vld [vmem:[%s1431 + $0x38] sm:$0xf]
      %v1447 = vld [vmem:[%s1431 + $0x3c] sm:$0xf]
      %v1464 = vunpack.c.l.b16 %v1432
      %v1465 = vunpack.c.l.b16 %v1433
      %v1466 = vunpack.c.l.b16 %v1434
      %v1467 = vunpack.c.l.b16 %v1435
      %v1468 = vunpack.c.l.b16 %v1436
      %v1469 = vunpack.c.l.b16 %v1437
      %v1470 = vunpack.c.l.b16 %v1438
      %v1471 = vunpack.c.l.b16 %v1439
      %v1472 = vunpack.c.l.b16 %v1440
      %v1473 = vunpack.c.l.b16 %v1441
      %v1474 = vunpack.c.l.b16 %v1442
      %v1475 = vunpack.c.l.b16 %v1443
      %v1476 = vunpack.c.l.b16 %v1444
      %v1477 = vunpack.c.l.b16 %v1445
      %v1478 = vunpack.c.l.b16 %v1446
      %v1479 = vunpack.c.l.b16 %v1447
      %v1480 = vpack.c.b16 %v1465, %v1464
      %v1481 = vpack.c.b16 %v1467, %v1466
      %v1482 = vpack.c.b16 %v1469, %v1468
      %v1483 = vpack.c.b16 %v1471, %v1470
      %v1484 = vpack.c.b16 %v1473, %v1472
      %v1485 = vpack.c.b16 %v1475, %v1474
      %v1486 = vpack.c.b16 %v1477, %v1476
      %v1487 = vpack.c.b16 %v1479, %v1478
      %1496 = vmatprep.subr.bf16.mxu0 0
      %1497 = vmatpush1.bf16.msra.mxu0 %v1480
      %1498 = vmatprep.subr.bf16.mxu0 0
      %1499 = vmatpush1.bf16.msra.mxu0 %v1481
      %1500 = vmatprep.subr.bf16.mxu0 0
      %1501 = vmatpush1.bf16.msra.mxu0 %v1482
      %1502 = vmatprep.subr.bf16.mxu0 0
      %1503 = vmatpush1.bf16.msra.mxu0 %v1483
      %1504 = vmatprep.subr.bf16.mxu0 0
      %1505 = vmatpush1.bf16.msra.mxu0 %v1484
      %1506 = vmatprep.subr.bf16.mxu0 0
      %1507 = vmatpush1.bf16.msra.mxu0 %v1485
      %1508 = vmatprep.subr.bf16.mxu0 0
      %1509 = vmatpush1.bf16.msra.mxu0 %v1486
      %1510 = vmatprep.subr.bf16.mxu0 0
      %1511 = vmatpush1.bf16.msra.mxu0 %v1487
      %1512 = vmatprep.subr.bf16.mxu0 0
      %1513 = vmatpush1.bf16.msra.mxu0 0
      %1514 = vmatprep.subr.bf16.mxu0 0
      %1515 = vmatpush1.bf16.msra.mxu0 0
      %1516 = vmatprep.subr.bf16.mxu0 0
      %1517 = vmatpush1.bf16.msra.mxu0 0
      %1518 = vmatprep.subr.bf16.mxu0 0
      %1519 = vmatpush1.bf16.msra.mxu0 0
      %1520 = vmatprep.subr.bf16.mxu0 0
      %1521 = vmatpush1.bf16.msra.mxu0 0
      %1522 = vmatprep.subr.bf16.mxu0 0
      %1523 = vmatpush1.bf16.msra.mxu0 0
      %1524 = vmatprep.subr.bf16.mxu0 0
      %1525 = vmatpush1.bf16.msra.mxu0 0
      %1526 = vmatprep.subr.bf16.mxu0 0
      %1527 = vmatpush1.bf16.msra.mxu0 0
      %1528 = vmatprep.mubr.bf16.mxu0 0
      %1529 = vmatmul.mubr.bf16.gmra.mrb[0].mxu0 %v1429
      %v1530 = vpop.f32.mrb[0].mxu0
      %v1531 = vadd.f32 0.0, %v1530
      %v1532 = vpop.f32.mrb[0].mxu0
      %v1533 = vpop.f32.mrb[0].mxu0
      %v1534 = vadd.f32 0.0, %v1533
      %v1535 = vpop.f32.mrb[0].mxu0
      %1536 = vdwg.mxu0
      %v1537 = vadd.f32 %v1248, %v1531
      %v1538 = vadd.f32 %v1249, %v1534
    $region90: #{tpu_custom_call.1} parent=1 // loop_footer
      %s344 = sadd.s32 1, %s340
    $region91: #{tpu_custom_call.1} parent=1 // loop_footer_branch
      %339 = sbr.rel target = $region87
    $region92: #{tpu_custom_call.1} parent=1 // loop_exit
      _
    %v1539 = vmul.u32 %v272, 8
    %v1540 = vadd.s32 %v1539, 7
    %vm1541 = vcmp.eq.s32.totalorder %v176, %v1540
    %v1542 = vsel %vm1541, 1, 0
    %v1543 = vcvt.s32.f32 %v1542
    %vm1544 = vcmask 130048
    %v1546 = vsel %vm1544, %v1543, 0
    %1548 = vmatprep.subr.mxu0 0.0
    %1549 = vmatpush1.msra.mxu0 %v345
    %1550 = vmatprep.subr.mxu0 0.0
    %1551 = vmatpush1.msra.mxu0 %v346
    %1552 = vmatprep.subr.mxu0 0.0
    %1553 = vmatpush1.msra.mxu0 0.0
    %1554 = vmatprep.subr.mxu0 0.0
    %1555 = vmatpush1.msra.mxu0 0.0
    %1556 = vmatprep.subr.mxu0 0.0
    %1557 = vmatpush1.msra.mxu0 0.0
    %1558 = vmatprep.subr.mxu0 0.0
    %1559 = vmatpush1.msra.mxu0 0.0
    %1560 = vmatprep.subr.mxu0 0.0
    %1561 = vmatpush1.msra.mxu0 0.0
    %1562 = vmatprep.subr.mxu0 0.0
    %1563 = vmatpush1.msra.mxu0 0.0
    %1564 = vmatprep.subr.mxu0 0.0
    %1565 = vmatpush1.msra.mxu0 0.0
    %1566 = vmatprep.subr.mxu0 0.0
    %1567 = vmatpush1.msra.mxu0 0.0
    %1568 = vmatprep.subr.mxu0 0.0
    %1569 = vmatpush1.msra.mxu0 0.0
    %1570 = vmatprep.subr.mxu0 0.0
    %1571 = vmatpush1.msra.mxu0 0.0
    %1572 = vmatprep.subr.mxu0 0.0
    %1573 = vmatpush1.msra.mxu0 0.0
    %1574 = vmatprep.subr.mxu0 0.0
    %1575 = vmatpush1.msra.mxu0 0.0
    %1576 = vmatprep.subr.mxu0 0.0
    %1577 = vmatpush1.msra.mxu0 0.0
    %1578 = vmatprep.subr.mxu0 0.0
    %1579 = vmatpush1.msra.mxu0 0.0
    %1580 = vmatprep.subr.mxu0 0.0
    %1581 = vmatpush1.msra.mxu0 0.0
    %1582 = vmatprep.subr.mxu0 0.0
    %1583 = vmatpush1.msra.mxu0 0.0
    %1584 = vmatprep.subr.mxu0 0.0
    %1585 = vmatpush1.msra.mxu0 0.0
    %1586 = vmatprep.subr.mxu0 0.0
    %1587 = vmatpush1.msra.mxu0 0.0
    %1588 = vmatprep.subr.mxu0 0.0
    %1589 = vmatpush1.msra.mxu0 0.0
    %1590 = vmatprep.subr.mxu0 0.0
    %1591 = vmatpush1.msra.mxu0 0.0
    %1592 = vmatprep.subr.mxu0 0.0
    %1593 = vmatpush1.msra.mxu0 0.0
    %1594 = vmatprep.subr.mxu0 0.0
    %1595 = vmatpush1.msra.mxu0 0.0
    %1596 = vmatprep.subr.mxu0 0.0
    %1597 = vmatpush1.msra.mxu0 0.0
    %1598 = vmatprep.subr.mxu0 0.0
    %1599 = vmatpush1.msra.mxu0 0.0
    %1600 = vmatprep.subr.mxu0 0.0
    %1601 = vmatpush1.msra.mxu0 0.0
    %1602 = vmatprep.subr.mxu0 0.0
    %1603 = vmatpush1.msra.mxu0 0.0
    %1604 = vmatprep.subr.mxu0 0.0
    %1605 = vmatpush1.msra.mxu0 0.0
    %1606 = vmatprep.subr.mxu0 0.0
    %1607 = vmatpush1.msra.mxu0 0.0
    %1608 = vmatprep.subr.mxu0 0.0
    %1609 = vmatpush1.msra.mxu0 0.0
    %1610 = vmatprep.subr.mxu0 0.0
    %1611 = vmatpush1.msra.mxu0 0.0
    %1612 = vmatprep.mubr.f32.mxu0 0.0
    %1613 = vmatmul.mubr.f32.gmra.mrb[0].mxu0 %v1546
    %v1614 = vpop.f32.mrb[0].mxu0
    %v1615 = vadd.f32 0.0, %v1614
    %v1616 = vpop.f32.mrb[0].mxu0
    %1617 = vdwg.mxu0
    %v1618 = vld [vmem:[#allocation13] sm:$0x1]
    %v1619 = vmul.f32 %v1615, %v1615
    %vm1620 = vcmask 1041408
    %v1621 = vsel %vm1620, %v1619, 0.0
    %1622 = vadd.xlane.f32.xlu0 %v1621
    %v1623 = vpop.xlane.xlu0 %1622
    %v1624 = vmul.f32 %v1623, 0.03125
    %v1625 = vadd.f32 %v1624, 1e-06
    %v1626 = vrsqrt.pop %v1625
    %v1627 = vmul.f32 %v1615, %v1626
    %v1629 = vlaneseq
    %v1630 = vshrl.u32 %v1629, 7
    %v1631 = vsub.s32 0, %v1630
    %v1632 = vrot.slane %v1618, %v1631
    %v1634 = vmul.f32 %v1627, %v1632
    %vm1635 = vcmp.lt.s32.totalorder %v176, 32
    %v1636 = vsel %vm1635, %v1634, -1e+30
    %v1637 = vsel %vm1620, %v1636, -inf
    %1638 = vmax.xlane.f32.xlu0 %v1637
    %v1639 = vpop.xlane.xlu0 %1638
    %vm1640 = vcmp.ge.f32.partialorder %v1636, %v1639
    %vm1641 = vmand %vm1640, %vm1635
    %v1642 = vsel %vm1641, %v176, 128
    %v1643 = vsel %vm1620, %v1642, 2147483647
    %v1644 = vand.u32 %v1643, 65535
    %v1645 = vshra.s32 %v1643, 16
    %v1646 = vcvt.s32.f32 %v1644
    %v1647 = vcvt.s32.f32 %v1645
    %1648 = vmin.xlane.f32.xlu0 %v1647
    %v1649 = vpop.xlane.xlu0 %1648
    %vm1650 = vcmp.eq.f32.partialorder %v1647, %v1649
    %v1651 = vsel %vm1650, %v1646, inf
    %1652 = vmin.xlane.f32.xlu0 %v1651
    %v1653 = vpop.xlane.xlu0 %1652
    %v1654 = vcvt.f32.s32 %v1653
    %v1655 = vcvt.f32.s32 %v1649
    %v1656 = vshll.u32 %v1655, 16
    %v1657 = vadd.s32 %v1656, %v1654
    %vm1658 = vcmask 1024
    %1659 = vst.msk [vmem:[%s11] sm:$0x3] %vm1658, %v1657
    // Predicated region
    $region93: #{tpu_custom_call.1} parent=1 // pred_check
      _
    $region94: #{tpu_custom_call.1} parent=1 // pred_check_branch
      %1661 = sbr.rel (0) target = $region96
    $region95: #{tpu_custom_call.1} parent=1 // pred_region
      _
    $region96: #{tpu_custom_call.1} parent=1 // pred_fallthru
      _
    // Predicated region
    $region97: #{tpu_custom_call.1} parent=1 // pred_check
      _
    $region98: #{tpu_custom_call.1} parent=1 // pred_check_branch
      %1663 = sbr.rel (0) target = $region100
    $region99: #{tpu_custom_call.1} parent=1 // pred_region
      _
    $region100: #{tpu_custom_call.1} parent=1 // pred_fallthru
      _
    %1664 = vsyncpa [#allocation3], 1
    %1665 = vsyncpa [#allocation5], 1
    %1666 = vsyncpa [#allocation8], 1
    %1667 = vsyncpa [#allocation11], 1
    %1668 = vsyncpa [#allocation14], 1
    %1669 = vsyncpa [#allocation17], 1

</llo_original>
